<compile_context>
chip_gen: v7x
topology: tpu7x:2x2x1
jax: 0.10.0
libtpu: 0.0.40
codegen_flags: <defaults>
</compile_context>

<pallas_src>
import functools

import jax
import jax.numpy as jnp
from jax import lax
from jax.experimental import pallas as pl
from jax.experimental.pallas import tpu as pltpu


def residual_block_kernel(x_ref, mask_ref, w1_ref, b1_ref, w2_ref, b2_ref,
                          out_ref, patches_ref, *, shifts, cp):
    # x_ref      : (Cp, L)  f32   lane-dense slab (G whole images)
    # mask_ref   : (9,  L)  f32   precomputed SAME-padding border masks (0/1)
    # w*_ref     : (Cp, 9*Cp) bf16 im2col-packed weights (tap-major, in-ch minor)
    # b*_ref     : (Cp, 1)  f32
    # out_ref    : (Cp, L)
    # patches_ref: (9*Cp, L) bf16  VMEM scratch, reused by both convs
    x = x_ref[...]                                          # f32, kept for residual

    def fill_patches(v):
        # Stream the 9 rolled+masked taps straight into the bf16 scratch.
        for t, shift in enumerate(shifts):
            if shift == 0:                                  # centre tap
                piece = v
            else:
                piece = pltpu.roll(v, shift=shift, axis=1) * mask_ref[t:t + 1, :]
            patches_ref[t * cp:(t + 1) * cp, :] = piece.astype(jnp.bfloat16)

    def conv3x3(w_ref, b_ref):
        # Single im2col MXU dot, bf16 operands, f32 accumulation.
        return jnp.dot(w_ref[...], patches_ref[...],
                       preferred_element_type=jnp.float32) + b_ref[...]

    fill_patches(x)
    h = jnp.maximum(conv3x3(w1_ref, b1_ref), 0.0)           # ReLU in f32 (VPU)
    fill_patches(h)
    out_ref[...] = (conv3x3(w2_ref, b2_ref) + x).astype(out_ref.dtype)


@jax.jit
def residual_block(x_nchw, w1, b1, w2, b2):
    """x_nchw: (N, C, H, W) f32; w*: (3, 3, C, C) HWIO; b*: (C,)."""
    N, C, H, W = x_nchw.shape
    HW = H * W
    SUB = 16                               # bf16 sublane tile -> aligned slab stores
    Cp = ((C + SUB - 1) // SUB) * SUB

    # Fold whole images into the lane axis: a few thousand lanes per step.
    target_lanes = 4096
    G = max(1, min(N, target_lanes // HW))
    while N % G:
        G -= 1
    L = G * HW
    num_groups = N // G

    # ---- host-side packing (tiny one-off XLA ops) ----
    x = jnp.pad(x_nchw, ((0, 0), (0, Cp - C), (0, 0), (0, 0)))
    x = x.reshape(num_groups, G, Cp, HW).transpose(0, 2, 1, 3).reshape(
        num_groups, Cp, L)

    def pack(w):                           # HWIO (3,3,C,C) -> (Cp, 9*Cp) bf16
        wp = jnp.zeros((3, 3, Cp, Cp), w.dtype).at[:, :, :C, :C].set(w)
        return jnp.transpose(wp, (3, 0, 1, 2)).reshape(Cp, 9 * Cp).astype(
            jnp.bfloat16)

    def pad_bias(b):
        return jnp.pad(b, (0, Cp - C)).reshape(Cp, 1).astype(jnp.float32)

    w1p, w2p = pack(w1), pack(w2)
    b1c, b2c = pad_bias(b1), pad_bias(b2)

    # ---- hoisted border masks + static lane shifts ----
    pos = jnp.arange(L, dtype=jnp.int32)
    row = (pos // W) % H                   # row *within its image*: no cross-image leak
    col = pos % W
    shifts, mask_rows = [], []
    for dy in range(3):
        for dx in range(3):
            oy, ox = dy - 1, dx - 1
            shifts.append((-(oy * W + ox)) % L)   # lane p reads p + oy*W + ox
            valid = ((row + oy >= 0) & (row + oy < H) &
                     (col + ox >= 0) & (col + ox < W))
            mask_rows.append(valid.astype(jnp.float32))
    masks = jnp.stack(mask_rows, axis=0)          # (9, L)

    kernel = functools.partial(residual_block_kernel,
                               shifts=tuple(shifts), cp=Cp)

    flops = 2 * (2 * 9 * Cp * Cp * L) * num_groups          # two convs
    bytes_accessed = int(2 * x.size * 4 + (w1p.size + w2p.size) * 2
                         + masks.size * 4 + (b1c.size + b2c.size) * 4)
    cost = pl.CostEstimate(flops=flops, transcendentals=0,
                           bytes_accessed=bytes_accessed)

    out = pl.pallas_call(
        kernel,
        out_shape=jax.ShapeDtypeStruct((num_groups, Cp, L), x_nchw.dtype),
        grid_spec=pltpu.PrefetchScalarGridSpec(
            num_scalar_prefetch=0,
            grid=(num_groups,),
            in_specs=[
                pl.BlockSpec((None, Cp, L), lambda g: (g, 0, 0)),   # x slab
                pl.BlockSpec((9, L), lambda g: (0, 0)),             # border masks
                pl.BlockSpec((Cp, 9 * Cp), lambda g: (0, 0)),       # w1
                pl.BlockSpec((Cp, 1), lambda g: (0, 0)),            # b1
                pl.BlockSpec((Cp, 9 * Cp), lambda g: (0, 0)),       # w2
                pl.BlockSpec((Cp, 1), lambda g: (0, 0)),            # b2
            ],
            out_specs=pl.BlockSpec((None, Cp, L), lambda g: (g, 0, 0)),
            scratch_shapes=[pltpu.VMEM((9 * Cp, L), jnp.bfloat16)],
        ),
        compiler_params=pltpu.CompilerParams(
            dimension_semantics=("parallel",),
            vmem_limit_bytes=32 * 1024 * 1024),
        cost_estimate=cost,
    )(x, masks, w1p, b1c, w2p, b2c)

    out = out.reshape(num_groups, Cp, G, HW).transpose(0, 2, 1, 3)
    return out.reshape(N, Cp, H, W)[:, :C]


def _reference(x_nchw, w1, b1, w2, b2):
    """Pure-JAX f32 reference (lax conv, NHWC/HWIO) for validation."""
    x = jnp.transpose(x_nchw, (0, 2, 3, 1))
    dn = ('NHWC', 'HWIO', 'NHWC')
    h = lax.conv_general_dilated(x, w1, (1, 1), 'SAME',
                                 dimension_numbers=dn) + b1[None, None, None, :]
    h = jnp.maximum(h, 0.0)
    o = lax.conv_general_dilated(h, w2, (1, 1), 'SAME',
                                 dimension_numbers=dn) + b2[None, None, None, :]
    o = o + x
    return jnp.transpose(o, (0, 3, 1, 2))


if __name__ == "__main__":
    N, C, H, W = 2, 4, 16, 16
    key = jax.random.PRNGKey(0)
    kx, kw1, kb1, kw2, kb2 = jax.random.split(key, 5)

    x = jax.random.normal(kx, (N, C, H, W), jnp.float32)
    scale = 1.0 / jnp.sqrt(9.0 * C)          # ~PyTorch conv fan-in scaling
    w1 = jax.random.normal(kw1, (3, 3, C, C), jnp.float32) * scale
    b1 = jax.random.normal(kb1, (C,), jnp.float32) * scale
    w2 = jax.random.normal(kw2, (3, 3, C, C), jnp.float32) * scale
    b2 = jax.random.normal(kb2, (C,), jnp.float32) * scale

    out = jax.block_until_ready(residual_block(x, w1, b1, w2, b2))
    ref = jax.block_until_ready(_reference(x, w1, b1, w2, b2))

    assert out.shape == (N, C, H, W)
    # bf16 MXU operands (f32 accumulation / bias / ReLU / residual): tolerance
    # loosened accordingly vs. the pure-f32 reference.
    err = jnp.abs(out - ref)
    assert jnp.max(err) < 1e-1, f"max err {jnp.max(err)}"
    assert jnp.mean(err) < 1.5e-2, f"mean err {jnp.mean(err)}"

    print("KERNEL_OK")
</pallas_src>

<mosaic_0001>
module attributes {stable_mosaic.version = 11 : i64} {
  func.func @residual_block_kernel(%arg0: i32, %arg1: memref<1x16x512xf32, #tpu.memory_space<vmem>>, %arg2: memref<9x512xf32, #tpu.memory_space<vmem>>, %arg3: memref<16x144xbf16, #tpu.memory_space<vmem>>, %arg4: memref<16x1xf32, #tpu.memory_space<vmem>>, %arg5: memref<16x144xbf16, #tpu.memory_space<vmem>>, %arg6: memref<16x1xf32, #tpu.memory_space<vmem>>, %arg7: memref<1x16x512xf32, #tpu.memory_space<vmem>>, %arg8: memref<144x512xbf16, #tpu.memory_space<vmem>>) attributes {dimension_semantics = [#tpu.dimension_semantics<parallel>], iteration_bounds = array<i64: 1>, scalar_prefetch = 0 : i64, scratch_operands = 1 : i64, tpu.core_type = #tpu.core_type<tc>, window_params = [{transform_indices = @transform_0, window_bounds = array<i64: 1, 16, 512>}, {pipeline_mode = #tpu.pipeline_mode<synchronous>, transform_indices = @transform_1, window_bounds = array<i64: 9, 512>}, {pipeline_mode = #tpu.pipeline_mode<synchronous>, transform_indices = @transform_2, window_bounds = array<i64: 16, 144>}, {pipeline_mode = #tpu.pipeline_mode<synchronous>, transform_indices = @transform_3, window_bounds = array<i64: 16, 1>}, {pipeline_mode = #tpu.pipeline_mode<synchronous>, transform_indices = @transform_4, window_bounds = array<i64: 16, 144>}, {pipeline_mode = #tpu.pipeline_mode<synchronous>, transform_indices = @transform_5, window_bounds = array<i64: 16, 1>}, {transform_indices = @transform_6, window_bounds = array<i64: 1, 16, 512>}]} {
    %c0 = arith.constant 0 : index
    %c0_0 = arith.constant 0 : index
    %c0_1 = arith.constant 0 : index
    %0 = vector.load %arg1[%c0, %c0_0, %c0_1] : memref<1x16x512xf32, #tpu.memory_space<vmem>>, vector<1x16x512xf32>
    %1 = vector.shape_cast %0 : vector<1x16x512xf32> to vector<16x512xf32>
    %c17_i32 = arith.constant 17 : i32
    %2 = tpu.dynamic_rotate %1 by %c17_i32 dim 1 : vector<16x512xf32>, i32 -> vector<16x512xf32>
    %c0_2 = arith.constant 0 : index
    %c0_3 = arith.constant 0 : index
    %3 = vector.load %arg2[%c0_2, %c0_3] : memref<9x512xf32, #tpu.memory_space<vmem>>, vector<1x512xf32>
    %4 = vector.broadcast %3 : vector<1x512xf32> to vector<16x512xf32>
    %5 = arith.mulf %2, %4 : vector<16x512xf32>
    %6 = arith.truncf %5 : vector<16x512xf32> to vector<16x512xbf16>
    %c0_4 = arith.constant 0 : index
    %c0_5 = arith.constant 0 : index
    %7 = vector.load %arg8[%c0_4, %c0_5] : memref<144x512xbf16, #tpu.memory_space<vmem>>, vector<16x512xbf16>
    tpu.vector_store %arg8[%c0_4, %c0_5], %6 {strides = array<i32>} : memref<144x512xbf16, #tpu.memory_space<vmem>>, vector<16x512xbf16>,
    %c16_i32 = arith.constant 16 : i32
    %8 = tpu.dynamic_rotate %1 by %c16_i32 dim 1 : vector<16x512xf32>, i32 -> vector<16x512xf32>
    %c1 = arith.constant 1 : index
    %c0_6 = arith.constant 0 : index
    %9 = vector.load %arg2[%c1, %c0_6] : memref<9x512xf32, #tpu.memory_space<vmem>>, vector<1x512xf32>
    %10 = vector.broadcast %9 : vector<1x512xf32> to vector<16x512xf32>
    %11 = arith.mulf %8, %10 : vector<16x512xf32>
    %12 = arith.truncf %11 : vector<16x512xf32> to vector<16x512xbf16>
    %c16 = arith.constant 16 : index
    %c0_7 = arith.constant 0 : index
    %13 = vector.load %arg8[%c16, %c0_7] : memref<144x512xbf16, #tpu.memory_space<vmem>>, vector<16x512xbf16>
    tpu.vector_store %arg8[%c16, %c0_7], %12 {strides = array<i32>} : memref<144x512xbf16, #tpu.memory_space<vmem>>, vector<16x512xbf16>,
    %c15_i32 = arith.constant 15 : i32
    %14 = tpu.dynamic_rotate %1 by %c15_i32 dim 1 : vector<16x512xf32>, i32 -> vector<16x512xf32>
    %c2 = arith.constant 2 : index
    %c0_8 = arith.constant 0 : index
    %15 = vector.load %arg2[%c2, %c0_8] : memref<9x512xf32, #tpu.memory_space<vmem>>, vector<1x512xf32>
    %16 = vector.broadcast %15 : vector<1x512xf32> to vector<16x512xf32>
    %17 = arith.mulf %14, %16 : vector<16x512xf32>
    %18 = arith.truncf %17 : vector<16x512xf32> to vector<16x512xbf16>
    %c32 = arith.constant 32 : index
    %c0_9 = arith.constant 0 : index
    %19 = vector.load %arg8[%c32, %c0_9] : memref<144x512xbf16, #tpu.memory_space<vmem>>, vector<16x512xbf16>
    tpu.vector_store %arg8[%c32, %c0_9], %18 {strides = array<i32>} : memref<144x512xbf16, #tpu.memory_space<vmem>>, vector<16x512xbf16>,
    %c1_i32 = arith.constant 1 : i32
    %20 = tpu.dynamic_rotate %1 by %c1_i32 dim 1 : vector<16x512xf32>, i32 -> vector<16x512xf32>
    %c3 = arith.constant 3 : index
    %c0_10 = arith.constant 0 : index
    %21 = vector.load %arg2[%c3, %c0_10] : memref<9x512xf32, #tpu.memory_space<vmem>>, vector<1x512xf32>
    %22 = vector.broadcast %21 : vector<1x512xf32> to vector<16x512xf32>
    %23 = arith.mulf %20, %22 : vector<16x512xf32>
    %24 = arith.truncf %23 : vector<16x512xf32> to vector<16x512xbf16>
    %c48 = arith.constant 48 : index
    %c0_11 = arith.constant 0 : index
    %25 = vector.load %arg8[%c48, %c0_11] : memref<144x512xbf16, #tpu.memory_space<vmem>>, vector<16x512xbf16>
    tpu.vector_store %arg8[%c48, %c0_11], %24 {strides = array<i32>} : memref<144x512xbf16, #tpu.memory_space<vmem>>, vector<16x512xbf16>,
    %26 = arith.truncf %1 : vector<16x512xf32> to vector<16x512xbf16>
    %c64 = arith.constant 64 : index
    %c0_12 = arith.constant 0 : index
    %27 = vector.load %arg8[%c64, %c0_12] : memref<144x512xbf16, #tpu.memory_space<vmem>>, vector<16x512xbf16>
    tpu.vector_store %arg8[%c64, %c0_12], %26 {strides = array<i32>} : memref<144x512xbf16, #tpu.memory_space<vmem>>, vector<16x512xbf16>,
    %c511_i32 = arith.constant 511 : i32
    %28 = tpu.dynamic_rotate %1 by %c511_i32 dim 1 : vector<16x512xf32>, i32 -> vector<16x512xf32>
    %c5 = arith.constant 5 : index
    %c0_13 = arith.constant 0 : index
    %29 = vector.load %arg2[%c5, %c0_13] : memref<9x512xf32, #tpu.memory_space<vmem>>, vector<1x512xf32>
    %30 = vector.broadcast %29 : vector<1x512xf32> to vector<16x512xf32>
    %31 = arith.mulf %28, %30 : vector<16x512xf32>
    %32 = arith.truncf %31 : vector<16x512xf32> to vector<16x512xbf16>
    %c80 = arith.constant 80 : index
    %c0_14 = arith.constant 0 : index
    %33 = vector.load %arg8[%c80, %c0_14] : memref<144x512xbf16, #tpu.memory_space<vmem>>, vector<16x512xbf16>
    tpu.vector_store %arg8[%c80, %c0_14], %32 {strides = array<i32>} : memref<144x512xbf16, #tpu.memory_space<vmem>>, vector<16x512xbf16>,
    %c497_i32 = arith.constant 497 : i32
    %34 = tpu.dynamic_rotate %1 by %c497_i32 dim 1 : vector<16x512xf32>, i32 -> vector<16x512xf32>
    %c6 = arith.constant 6 : index
    %c0_15 = arith.constant 0 : index
    %35 = vector.load %arg2[%c6, %c0_15] : memref<9x512xf32, #tpu.memory_space<vmem>>, vector<1x512xf32>
    %36 = vector.broadcast %35 : vector<1x512xf32> to vector<16x512xf32>
    %37 = arith.mulf %34, %36 : vector<16x512xf32>
    %38 = arith.truncf %37 : vector<16x512xf32> to vector<16x512xbf16>
    %c96 = arith.constant 96 : index
    %c0_16 = arith.constant 0 : index
    %39 = vector.load %arg8[%c96, %c0_16] : memref<144x512xbf16, #tpu.memory_space<vmem>>, vector<16x512xbf16>
    tpu.vector_store %arg8[%c96, %c0_16], %38 {strides = array<i32>} : memref<144x512xbf16, #tpu.memory_space<vmem>>, vector<16x512xbf16>,
    %c496_i32 = arith.constant 496 : i32
    %40 = tpu.dynamic_rotate %1 by %c496_i32 dim 1 : vector<16x512xf32>, i32 -> vector<16x512xf32>
    %c7 = arith.constant 7 : index
    %c0_17 = arith.constant 0 : index
    %41 = vector.load %arg2[%c7, %c0_17] : memref<9x512xf32, #tpu.memory_space<vmem>>, vector<1x512xf32>
    %42 = vector.broadcast %41 : vector<1x512xf32> to vector<16x512xf32>
    %43 = arith.mulf %40, %42 : vector<16x512xf32>
    %44 = arith.truncf %43 : vector<16x512xf32> to vector<16x512xbf16>
    %c112 = arith.constant 112 : index
    %c0_18 = arith.constant 0 : index
    %45 = vector.load %arg8[%c112, %c0_18] : memref<144x512xbf16, #tpu.memory_space<vmem>>, vector<16x512xbf16>
    tpu.vector_store %arg8[%c112, %c0_18], %44 {strides = array<i32>} : memref<144x512xbf16, #tpu.memory_space<vmem>>, vector<16x512xbf16>,
    %c495_i32 = arith.constant 495 : i32
    %46 = tpu.dynamic_rotate %1 by %c495_i32 dim 1 : vector<16x512xf32>, i32 -> vector<16x512xf32>
    %c8 = arith.constant 8 : index
    %c0_19 = arith.constant 0 : index
    %47 = vector.load %arg2[%c8, %c0_19] : memref<9x512xf32, #tpu.memory_space<vmem>>, vector<1x512xf32>
    %48 = vector.broadcast %47 : vector<1x512xf32> to vector<16x512xf32>
    %49 = arith.mulf %46, %48 : vector<16x512xf32>
    %50 = arith.truncf %49 : vector<16x512xf32> to vector<16x512xbf16>
    %c128 = arith.constant 128 : index
    %c0_20 = arith.constant 0 : index
    %51 = vector.load %arg8[%c128, %c0_20] : memref<144x512xbf16, #tpu.memory_space<vmem>>, vector<16x512xbf16>
    tpu.vector_store %arg8[%c128, %c0_20], %50 {strides = array<i32>} : memref<144x512xbf16, #tpu.memory_space<vmem>>, vector<16x512xbf16>,
    %c0_21 = arith.constant 0 : index
    %c0_22 = arith.constant 0 : index
    %52 = vector.load %arg3[%c0_21, %c0_22] : memref<16x144xbf16, #tpu.memory_space<vmem>>, vector<16x144xbf16>
    %c0_23 = arith.constant 0 : index
    %c0_24 = arith.constant 0 : index
    %53 = vector.load %arg8[%c0_23, %c0_24] : memref<144x512xbf16, #tpu.memory_space<vmem>>, vector<144x512xbf16>
    %cst = arith.constant dense<0.000000e+00> : vector<16x512xf32>
    %54 = tpu.matmul %52, %53, %cst {dimension_numbers = #tpu.dot_dimension_numbers<[1], [0], [0], [1], [0, 0, 1, 1], [], []>} : vector<16x144xbf16>, vector<144x512xbf16>, vector<16x512xf32> -> vector<16x512xf32>
    %c0_25 = arith.constant 0 : index
    %c0_26 = arith.constant 0 : index
    %55 = vector.load %arg4[%c0_25, %c0_26] : memref<16x1xf32, #tpu.memory_space<vmem>>, vector<16x1xf32>
    %56 = vector.broadcast %55 : vector<16x1xf32> to vector<16x512xf32>
    %57 = arith.addf %54, %56 : vector<16x512xf32>
    %cst_27 = arith.constant 0.000000e+00 : f32
    %58 = vector.broadcast %cst_27 : f32 to vector<16x512xf32>
    %59 = arith.maximumf %57, %58 : vector<16x512xf32>
    %c17_i32_28 = arith.constant 17 : i32
    %60 = tpu.dynamic_rotate %59 by %c17_i32_28 dim 1 : vector<16x512xf32>, i32 -> vector<16x512xf32>
    %c0_29 = arith.constant 0 : index
    %c0_30 = arith.constant 0 : index
    %61 = vector.load %arg2[%c0_29, %c0_30] : memref<9x512xf32, #tpu.memory_space<vmem>>, vector<1x512xf32>
    %62 = vector.broadcast %61 : vector<1x512xf32> to vector<16x512xf32>
    %63 = arith.mulf %60, %62 : vector<16x512xf32>
    %64 = arith.truncf %63 : vector<16x512xf32> to vector<16x512xbf16>
    %c0_31 = arith.constant 0 : index
    %c0_32 = arith.constant 0 : index
    %65 = vector.load %arg8[%c0_31, %c0_32] : memref<144x512xbf16, #tpu.memory_space<vmem>>, vector<16x512xbf16>
    tpu.vector_store %arg8[%c0_31, %c0_32], %64 {strides = array<i32>} : memref<144x512xbf16, #tpu.memory_space<vmem>>, vector<16x512xbf16>,
    %c16_i32_33 = arith.constant 16 : i32
    %66 = tpu.dynamic_rotate %59 by %c16_i32_33 dim 1 : vector<16x512xf32>, i32 -> vector<16x512xf32>
    %c1_34 = arith.constant 1 : index
    %c0_35 = arith.constant 0 : index
    %67 = vector.load %arg2[%c1_34, %c0_35] : memref<9x512xf32, #tpu.memory_space<vmem>>, vector<1x512xf32>
    %68 = vector.broadcast %67 : vector<1x512xf32> to vector<16x512xf32>
    %69 = arith.mulf %66, %68 : vector<16x512xf32>
    %70 = arith.truncf %69 : vector<16x512xf32> to vector<16x512xbf16>
    %c16_36 = arith.constant 16 : index
    %c0_37 = arith.constant 0 : index
    %71 = vector.load %arg8[%c16_36, %c0_37] : memref<144x512xbf16, #tpu.memory_space<vmem>>, vector<16x512xbf16>
    tpu.vector_store %arg8[%c16_36, %c0_37], %70 {strides = array<i32>} : memref<144x512xbf16, #tpu.memory_space<vmem>>, vector<16x512xbf16>,
    %c15_i32_38 = arith.constant 15 : i32
    %72 = tpu.dynamic_rotate %59 by %c15_i32_38 dim 1 : vector<16x512xf32>, i32 -> vector<16x512xf32>
    %c2_39 = arith.constant 2 : index
    %c0_40 = arith.constant 0 : index
    %73 = vector.load %arg2[%c2_39, %c0_40] : memref<9x512xf32, #tpu.memory_space<vmem>>, vector<1x512xf32>
    %74 = vector.broadcast %73 : vector<1x512xf32> to vector<16x512xf32>
    %75 = arith.mulf %72, %74 : vector<16x512xf32>
    %76 = arith.truncf %75 : vector<16x512xf32> to vector<16x512xbf16>
    %c32_41 = arith.constant 32 : index
    %c0_42 = arith.constant 0 : index
    %77 = vector.load %arg8[%c32_41, %c0_42] : memref<144x512xbf16, #tpu.memory_space<vmem>>, vector<16x512xbf16>
    tpu.vector_store %arg8[%c32_41, %c0_42], %76 {strides = array<i32>} : memref<144x512xbf16, #tpu.memory_space<vmem>>, vector<16x512xbf16>,
    %c1_i32_43 = arith.constant 1 : i32
    %78 = tpu.dynamic_rotate %59 by %c1_i32_43 dim 1 : vector<16x512xf32>, i32 -> vector<16x512xf32>
    %c3_44 = arith.constant 3 : index
    %c0_45 = arith.constant 0 : index
    %79 = vector.load %arg2[%c3_44, %c0_45] : memref<9x512xf32, #tpu.memory_space<vmem>>, vector<1x512xf32>
    %80 = vector.broadcast %79 : vector<1x512xf32> to vector<16x512xf32>
    %81 = arith.mulf %78, %80 : vector<16x512xf32>
    %82 = arith.truncf %81 : vector<16x512xf32> to vector<16x512xbf16>
    %c48_46 = arith.constant 48 : index
    %c0_47 = arith.constant 0 : index
    %83 = vector.load %arg8[%c48_46, %c0_47] : memref<144x512xbf16, #tpu.memory_space<vmem>>, vector<16x512xbf16>
    tpu.vector_store %arg8[%c48_46, %c0_47], %82 {strides = array<i32>} : memref<144x512xbf16, #tpu.memory_space<vmem>>, vector<16x512xbf16>,
    %84 = arith.truncf %59 : vector<16x512xf32> to vector<16x512xbf16>
    %c64_48 = arith.constant 64 : index
    %c0_49 = arith.constant 0 : index
    %85 = vector.load %arg8[%c64_48, %c0_49] : memref<144x512xbf16, #tpu.memory_space<vmem>>, vector<16x512xbf16>
    tpu.vector_store %arg8[%c64_48, %c0_49], %84 {strides = array<i32>} : memref<144x512xbf16, #tpu.memory_space<vmem>>, vector<16x512xbf16>,
    %c511_i32_50 = arith.constant 511 : i32
    %86 = tpu.dynamic_rotate %59 by %c511_i32_50 dim 1 : vector<16x512xf32>, i32 -> vector<16x512xf32>
    %c5_51 = arith.constant 5 : index
    %c0_52 = arith.constant 0 : index
    %87 = vector.load %arg2[%c5_51, %c0_52] : memref<9x512xf32, #tpu.memory_space<vmem>>, vector<1x512xf32>
    %88 = vector.broadcast %87 : vector<1x512xf32> to vector<16x512xf32>
    %89 = arith.mulf %86, %88 : vector<16x512xf32>
    %90 = arith.truncf %89 : vector<16x512xf32> to vector<16x512xbf16>
    %c80_53 = arith.constant 80 : index
    %c0_54 = arith.constant 0 : index
    %91 = vector.load %arg8[%c80_53, %c0_54] : memref<144x512xbf16, #tpu.memory_space<vmem>>, vector<16x512xbf16>
    tpu.vector_store %arg8[%c80_53, %c0_54], %90 {strides = array<i32>} : memref<144x512xbf16, #tpu.memory_space<vmem>>, vector<16x512xbf16>,
    %c497_i32_55 = arith.constant 497 : i32
    %92 = tpu.dynamic_rotate %59 by %c497_i32_55 dim 1 : vector<16x512xf32>, i32 -> vector<16x512xf32>
    %c6_56 = arith.constant 6 : index
    %c0_57 = arith.constant 0 : index
    %93 = vector.load %arg2[%c6_56, %c0_57] : memref<9x512xf32, #tpu.memory_space<vmem>>, vector<1x512xf32>
    %94 = vector.broadcast %93 : vector<1x512xf32> to vector<16x512xf32>
    %95 = arith.mulf %92, %94 : vector<16x512xf32>
    %96 = arith.truncf %95 : vector<16x512xf32> to vector<16x512xbf16>
    %c96_58 = arith.constant 96 : index
    %c0_59 = arith.constant 0 : index
    %97 = vector.load %arg8[%c96_58, %c0_59] : memref<144x512xbf16, #tpu.memory_space<vmem>>, vector<16x512xbf16>
    tpu.vector_store %arg8[%c96_58, %c0_59], %96 {strides = array<i32>} : memref<144x512xbf16, #tpu.memory_space<vmem>>, vector<16x512xbf16>,
    %c496_i32_60 = arith.constant 496 : i32
    %98 = tpu.dynamic_rotate %59 by %c496_i32_60 dim 1 : vector<16x512xf32>, i32 -> vector<16x512xf32>
    %c7_61 = arith.constant 7 : index
    %c0_62 = arith.constant 0 : index
    %99 = vector.load %arg2[%c7_61, %c0_62] : memref<9x512xf32, #tpu.memory_space<vmem>>, vector<1x512xf32>
    %100 = vector.broadcast %99 : vector<1x512xf32> to vector<16x512xf32>
    %101 = arith.mulf %98, %100 : vector<16x512xf32>
    %102 = arith.truncf %101 : vector<16x512xf32> to vector<16x512xbf16>
    %c112_63 = arith.constant 112 : index
    %c0_64 = arith.constant 0 : index
    %103 = vector.load %arg8[%c112_63, %c0_64] : memref<144x512xbf16, #tpu.memory_space<vmem>>, vector<16x512xbf16>
    tpu.vector_store %arg8[%c112_63, %c0_64], %102 {strides = array<i32>} : memref<144x512xbf16, #tpu.memory_space<vmem>>, vector<16x512xbf16>,
    %c495_i32_65 = arith.constant 495 : i32
    %104 = tpu.dynamic_rotate %59 by %c495_i32_65 dim 1 : vector<16x512xf32>, i32 -> vector<16x512xf32>
    %c8_66 = arith.constant 8 : index
    %c0_67 = arith.constant 0 : index
    %105 = vector.load %arg2[%c8_66, %c0_67] : memref<9x512xf32, #tpu.memory_space<vmem>>, vector<1x512xf32>
    %106 = vector.broadcast %105 : vector<1x512xf32> to vector<16x512xf32>
    %107 = arith.mulf %104, %106 : vector<16x512xf32>
    %108 = arith.truncf %107 : vector<16x512xf32> to vector<16x512xbf16>
    %c128_68 = arith.constant 128 : index
    %c0_69 = arith.constant 0 : index
    %109 = vector.load %arg8[%c128_68, %c0_69] : memref<144x512xbf16, #tpu.memory_space<vmem>>, vector<16x512xbf16>
    tpu.vector_store %arg8[%c128_68, %c0_69], %108 {strides = array<i32>} : memref<144x512xbf16, #tpu.memory_space<vmem>>, vector<16x512xbf16>,
    %c0_70 = arith.constant 0 : index
    %c0_71 = arith.constant 0 : index
    %110 = vector.load %arg5[%c0_70, %c0_71] : memref<16x144xbf16, #tpu.memory_space<vmem>>, vector<16x144xbf16>
    %c0_72 = arith.constant 0 : index
    %c0_73 = arith.constant 0 : index
    %111 = vector.load %arg8[%c0_72, %c0_73] : memref<144x512xbf16, #tpu.memory_space<vmem>>, vector<144x512xbf16>
    %cst_74 = arith.constant dense<0.000000e+00> : vector<16x512xf32>
    %112 = tpu.matmul %110, %111, %cst_74 {dimension_numbers = #tpu.dot_dimension_numbers<[1], [0], [0], [1], [0, 0, 1, 1], [], []>} : vector<16x144xbf16>, vector<144x512xbf16>, vector<16x512xf32> -> vector<16x512xf32>
    %c0_75 = arith.constant 0 : index
    %c0_76 = arith.constant 0 : index
    %113 = vector.load %arg6[%c0_75, %c0_76] : memref<16x1xf32, #tpu.memory_space<vmem>>, vector<16x1xf32>
    %114 = vector.broadcast %113 : vector<16x1xf32> to vector<16x512xf32>
    %115 = arith.addf %112, %114 : vector<16x512xf32>
    %116 = arith.addf %115, %1 : vector<16x512xf32>
    %c0_77 = arith.constant 0 : index
    %c0_78 = arith.constant 0 : index
    %c0_79 = arith.constant 0 : index
    %117 = vector.load %arg7[%c0_77, %c0_78, %c0_79] : memref<1x16x512xf32, #tpu.memory_space<vmem>>, vector<1x16x512xf32>
    %118 = vector.shape_cast %117 : vector<1x16x512xf32> to vector<16x512xf32>
    %119 = vector.shape_cast %116 : vector<16x512xf32> to vector<1x16x512xf32>
    tpu.vector_store %arg7[%c0_77, %c0_78, %c0_79], %119 {strides = array<i32>} : memref<1x16x512xf32, #tpu.memory_space<vmem>>, vector<1x16x512xf32>,
    return
  }
  func.func @transform_0(%arg0: i32) -> (i32, i32, i32) {
    %c0_i32 = arith.constant 0 : i32
    %c0_i32_0 = arith.constant 0 : i32
    %c0_i32_1 = arith.constant 0 : i32
    return %arg0, %c0_i32, %c0_i32_0 : i32, i32, i32
  }
  func.func @transform_1(%arg0: i32) -> (i32, i32) {
    %c0_i32 = arith.constant 0 : i32
    %c0_i32_0 = arith.constant 0 : i32
    %c0_i32_1 = arith.constant 0 : i32
    return %c0_i32, %c0_i32_0 : i32, i32
  }
  func.func @transform_2(%arg0: i32) -> (i32, i32) {
    %c0_i32 = arith.constant 0 : i32
    %c0_i32_0 = arith.constant 0 : i32
    %c0_i32_1 = arith.constant 0 : i32
    return %c0_i32, %c0_i32_0 : i32, i32
  }
  func.func @transform_3(%arg0: i32) -> (i32, i32) {
    %c0_i32 = arith.constant 0 : i32
    %c0_i32_0 = arith.constant 0 : i32
    %c0_i32_1 = arith.constant 0 : i32
    return %c0_i32, %c0_i32_0 : i32, i32
  }
  func.func @transform_4(%arg0: i32) -> (i32, i32) {
    %c0_i32 = arith.constant 0 : i32
    %c0_i32_0 = arith.constant 0 : i32
    %c0_i32_1 = arith.constant 0 : i32
    return %c0_i32, %c0_i32_0 : i32, i32
  }
  func.func @transform_5(%arg0: i32) -> (i32, i32) {
    %c0_i32 = arith.constant 0 : i32
    %c0_i32_0 = arith.constant 0 : i32
    %c0_i32_1 = arith.constant 0 : i32
    return %c0_i32, %c0_i32_0 : i32, i32
  }
  func.func @transform_6(%arg0: i32) -> (i32, i32, i32) {
    %c0_i32 = arith.constant 0 : i32
    %c0_i32_0 = arith.constant 0 : i32
    %c0_i32_1 = arith.constant 0 : i32
    return %arg0, %c0_i32, %c0_i32_0 : i32, i32, i32
  }
}

</mosaic_0001>

<llo_original>
// kernel: residual_block.1
$region0: #{residual_block.1}
  #allocation0 [shape = 'u32[]', space=smem, size = 0x4, offset = 0x4, fixed_abs, tag = 'smem constant byte address 0x4 - core index']
  #allocation1 [shape = 'u32[144,128]{1,0:T(1,128)}', space=vmem, size = 0x12000, scoped, tag = 'internal scratch']
  #allocation2 [shape = 'bf16[144,512]{1,0:T(16,128)(2,1)}', space=vmem, size = 0x24000, scoped, tag = 'scratch operand']
  %s0 = inlined_call_operand.vmem [shape: f32[1,16,512], index: 0, kind: input, shape index: {}]
  %s1 = inlined_call_operand.vmem [shape: f32[9,512], index: 1, kind: input, shape index: {}]
  %s2 = inlined_call_operand.vmem [shape: bf16[16,144], index: 2, kind: input, shape index: {}]
  %s3 = inlined_call_operand.vmem [shape: f32[16,1], index: 3, kind: input, shape index: {}]
  %s4 = inlined_call_operand.vmem [shape: bf16[16,144], index: 4, kind: input, shape index: {}]
  %s5 = inlined_call_operand.vmem [shape: f32[16,1], index: 5, kind: input, shape index: {}]
  %s6 = inlined_call_operand.vmem [shape: f32[1,16,512], index: 6, kind: output, shape index: {}]
  %s7 = sld [smem:[#allocation0]]
  $region34: #{residual_block.1} parent=0
    _
  %s9 = ssub.s32 1, %s7
  %s10 = scalar_select 0, %s9, %s7
  // Predicated region
  $region2: #{residual_block.1} parent=0 // pred_check
    _
  $region3: #{residual_block.1} parent=0 // pred_check_branch
    %12 = sbr.rel (0) target = $region5
  $region4: #{residual_block.1} parent=0 // pred_region
    _
  $region5: #{residual_block.1} parent=0 // pred_fallthru
    _
  // Predicated region
  $region6: #{residual_block.1} parent=0 // pred_check
    _
  $region7: #{residual_block.1} parent=0 // pred_check_branch
    %14 = sbr.rel (0) target = $region9
  $region8: #{residual_block.1} parent=0 // pred_region
    _
  $region9: #{residual_block.1} parent=0 // pred_fallthru
    _
  // Predicated region
  $region10: #{residual_block.1} parent=0 // pred_check
    _
  $region11: #{residual_block.1} parent=0 // pred_check_branch
    %16 = sbr.rel (0) target = $region13
  $region12: #{residual_block.1} parent=0 // pred_region
    _
  $region13: #{residual_block.1} parent=0 // pred_fallthru
    _
  // Predicated region
  $region14: #{residual_block.1} parent=0 // pred_check
    _
  $region15: #{residual_block.1} parent=0 // pred_check_branch
    %18 = sbr.rel (0) target = $region17
  $region16: #{residual_block.1} parent=0 // pred_region
    _
  $region17: #{residual_block.1} parent=0 // pred_fallthru
    _
  // Predicated region
  $region18: #{residual_block.1} parent=0 // pred_check
    _
  $region19: #{residual_block.1} parent=0 // pred_check_branch
    %20 = sbr.rel (0) target = $region21
  $region20: #{residual_block.1} parent=0 // pred_region
    _
  $region21: #{residual_block.1} parent=0 // pred_fallthru
    _
  // Predicated region
  $region22: #{residual_block.1} parent=0 // pred_check
    _
  $region23: #{residual_block.1} parent=0 // pred_check_branch
    %22 = sbr.rel (0) target = $region25
  $region24: #{residual_block.1} parent=0 // pred_region
    _
  $region25: #{residual_block.1} parent=0 // pred_fallthru
    _
  %v24 = vld [vmem:[%s0] sm:$0xff]
  %v25 = vld [vmem:[%s0 + $0x8] sm:$0xff]
  %v26 = vld [vmem:[%s0 + $0x10] sm:$0xff]
  %v27 = vld [vmem:[%s0 + $0x18] sm:$0xff]
  %v28 = vld [vmem:[%s0 + $0x20] sm:$0xff]
  %v29 = vld [vmem:[%s0 + $0x28] sm:$0xff]
  %v30 = vld [vmem:[%s0 + $0x30] sm:$0xff]
  %v31 = vld [vmem:[%s0 + $0x38] sm:$0xff]
  %32 = vrot.lane.b32.xlu0 %v24, 17
  %v33 = vpop.permute.xlu0 %32
  %34 = vrot.lane.b32.xlu0 %v28, 17
  %v35 = vpop.permute.xlu0 %34
  %36 = vrot.lane.b32.xlu0 %v25, 17
  %v37 = vpop.permute.xlu0 %36
  %38 = vrot.lane.b32.xlu0 %v29, 17
  %v39 = vpop.permute.xlu0 %38
  %40 = vrot.lane.b32.xlu0 %v26, 17
  %v41 = vpop.permute.xlu0 %40
  %42 = vrot.lane.b32.xlu0 %v30, 17
  %v43 = vpop.permute.xlu0 %42
  %44 = vrot.lane.b32.xlu0 %v27, 17
  %v45 = vpop.permute.xlu0 %44
  %46 = vrot.lane.b32.xlu0 %v31, 17
  %v47 = vpop.permute.xlu0 %46
  %v48 = vlaneseq
  %v49 = vand.u32 %v48, 127
  %vm50 = vcmp.lt.s32.totalorder %v49, 17
  %v51 = vsel %vm50, %v41, %v45
  %v52 = vsel %vm50, %v43, %v47
  %v53 = vsel %vm50, %v37, %v41
  %v54 = vsel %vm50, %v39, %v43
  %v55 = vsel %vm50, %v33, %v37
  %v56 = vsel %vm50, %v35, %v39
  %v57 = vsel %vm50, %v45, %v33
  %v58 = vsel %vm50, %v47, %v35
  %v59 = vld [vmem:[%s1] ss:$8 sm:$0xf]
  %v61 = vlaneseq
  %v62 = vshrl.u32 %v61, 7
  %v63 = vsub.s32 0, %v62
  %v64 = vrot.slane %v59, %v63
  %v65 = vlaneseq
  %v66 = vshrl.u32 %v65, 7
  %v67 = vsub.s32 1, %v66
  %v68 = vrot.slane %v59, %v67
  %v69 = vlaneseq
  %v70 = vshrl.u32 %v69, 7
  %v71 = vsub.s32 2, %v70
  %v72 = vrot.slane %v59, %v71
  %v73 = vlaneseq
  %v74 = vshrl.u32 %v73, 7
  %v75 = vsub.s32 3, %v74
  %v76 = vrot.slane %v59, %v75
  %v81 = vmul.f32 %v57, %v64
  %v82 = vmul.f32 %v55, %v68
  %v83 = vmul.f32 %v53, %v72
  %v84 = vmul.f32 %v51, %v76
  %v85 = vmul.f32 %v58, %v64
  %v86 = vmul.f32 %v56, %v68
  %v87 = vmul.f32 %v54, %v72
  %v88 = vmul.f32 %v52, %v76
  %v89 = vpack.c.bf16 %v85, %v81
  %v90 = vpack.c.bf16 %v86, %v82
  %v91 = vpack.c.bf16 %v87, %v83
  %v92 = vpack.c.bf16 %v88, %v84
  %93 = vst [vmem:[#allocation2] sm:$0xff] %v89
  %94 = vst [vmem:[#allocation2 + $0x8] sm:$0xff] %v90
  %95 = vst [vmem:[#allocation2 + $0x10] sm:$0xff] %v91
  %96 = vst [vmem:[#allocation2 + $0x18] sm:$0xff] %v92
  %97 = vrot.lane.b32.xlu0 %v24, 16
  %v98 = vpop.permute.xlu0 %97
  %99 = vrot.lane.b32.xlu0 %v28, 16
  %v100 = vpop.permute.xlu0 %99
  %101 = vrot.lane.b32.xlu0 %v25, 16
  %v102 = vpop.permute.xlu0 %101
  %103 = vrot.lane.b32.xlu0 %v29, 16
  %v104 = vpop.permute.xlu0 %103
  %105 = vrot.lane.b32.xlu0 %v26, 16
  %v106 = vpop.permute.xlu0 %105
  %107 = vrot.lane.b32.xlu0 %v30, 16
  %v108 = vpop.permute.xlu0 %107
  %109 = vrot.lane.b32.xlu0 %v27, 16
  %v110 = vpop.permute.xlu0 %109
  %111 = vrot.lane.b32.xlu0 %v31, 16
  %v112 = vpop.permute.xlu0 %111
  %vm113 = vcmp.lt.s32.totalorder %v49, 16
  %v114 = vsel %vm113, %v106, %v110
  %v115 = vsel %vm113, %v108, %v112
  %v116 = vsel %vm113, %v102, %v106
  %v117 = vsel %vm113, %v104, %v108
  %v118 = vsel %vm113, %v98, %v102
  %v119 = vsel %vm113, %v100, %v104
  %v120 = vsel %vm113, %v110, %v98
  %v121 = vsel %vm113, %v112, %v100
  %s122 = scalar_lea.vmem %s1, 1
  %v123 = vld [vmem:[%s122] ss:$8 sm:$0xf]
  %v125 = vlaneseq
  %v126 = vshrl.u32 %v125, 7
  %v127 = vsub.s32 0, %v126
  %v128 = vrot.slane %v123, %v127
  %v129 = vlaneseq
  %v130 = vshrl.u32 %v129, 7
  %v131 = vsub.s32 1, %v130
  %v132 = vrot.slane %v123, %v131
  %v133 = vlaneseq
  %v134 = vshrl.u32 %v133, 7
  %v135 = vsub.s32 2, %v134
  %v136 = vrot.slane %v123, %v135
  %v137 = vlaneseq
  %v138 = vshrl.u32 %v137, 7
  %v139 = vsub.s32 3, %v138
  %v140 = vrot.slane %v123, %v139
  %v145 = vmul.f32 %v120, %v128
  %v146 = vmul.f32 %v118, %v132
  %v147 = vmul.f32 %v116, %v136
  %v148 = vmul.f32 %v114, %v140
  %v149 = vmul.f32 %v121, %v128
  %v150 = vmul.f32 %v119, %v132
  %v151 = vmul.f32 %v117, %v136
  %v152 = vmul.f32 %v115, %v140
  %v153 = vpack.c.bf16 %v149, %v145
  %v154 = vpack.c.bf16 %v150, %v146
  %v155 = vpack.c.bf16 %v151, %v147
  %v156 = vpack.c.bf16 %v152, %v148
  %157 = vst [vmem:[#allocation2 + $0x20] sm:$0xff] %v153
  %158 = vst [vmem:[#allocation2 + $0x28] sm:$0xff] %v154
  %159 = vst [vmem:[#allocation2 + $0x30] sm:$0xff] %v155
  %160 = vst [vmem:[#allocation2 + $0x38] sm:$0xff] %v156
  %161 = vrot.lane.b32.xlu0 %v24, 15
  %v162 = vpop.permute.xlu0 %161
  %163 = vrot.lane.b32.xlu0 %v28, 15
  %v164 = vpop.permute.xlu0 %163
  %165 = vrot.lane.b32.xlu0 %v25, 15
  %v166 = vpop.permute.xlu0 %165
  %167 = vrot.lane.b32.xlu0 %v29, 15
  %v168 = vpop.permute.xlu0 %167
  %169 = vrot.lane.b32.xlu0 %v26, 15
  %v170 = vpop.permute.xlu0 %169
  %171 = vrot.lane.b32.xlu0 %v30, 15
  %v172 = vpop.permute.xlu0 %171
  %173 = vrot.lane.b32.xlu0 %v27, 15
  %v174 = vpop.permute.xlu0 %173
  %175 = vrot.lane.b32.xlu0 %v31, 15
  %v176 = vpop.permute.xlu0 %175
  %vm177 = vcmp.lt.s32.totalorder %v49, 15
  %v178 = vsel %vm177, %v170, %v174
  %v179 = vsel %vm177, %v172, %v176
  %v180 = vsel %vm177, %v166, %v170
  %v181 = vsel %vm177, %v168, %v172
  %v182 = vsel %vm177, %v162, %v166
  %v183 = vsel %vm177, %v164, %v168
  %v184 = vsel %vm177, %v174, %v162
  %v185 = vsel %vm177, %v176, %v164
  %s186 = scalar_lea.vmem %s1, 2
  %v187 = vld [vmem:[%s186] ss:$8 sm:$0xf]
  %v189 = vlaneseq
  %v190 = vshrl.u32 %v189, 7
  %v191 = vsub.s32 0, %v190
  %v192 = vrot.slane %v187, %v191
  %v193 = vlaneseq
  %v194 = vshrl.u32 %v193, 7
  %v195 = vsub.s32 1, %v194
  %v196 = vrot.slane %v187, %v195
  %v197 = vlaneseq
  %v198 = vshrl.u32 %v197, 7
  %v199 = vsub.s32 2, %v198
  %v200 = vrot.slane %v187, %v199
  %v201 = vlaneseq
  %v202 = vshrl.u32 %v201, 7
  %v203 = vsub.s32 3, %v202
  %v204 = vrot.slane %v187, %v203
  %v209 = vmul.f32 %v184, %v192
  %v210 = vmul.f32 %v182, %v196
  %v211 = vmul.f32 %v180, %v200
  %v212 = vmul.f32 %v178, %v204
  %v213 = vmul.f32 %v185, %v192
  %v214 = vmul.f32 %v183, %v196
  %v215 = vmul.f32 %v181, %v200
  %v216 = vmul.f32 %v179, %v204
  %v217 = vpack.c.bf16 %v213, %v209
  %v218 = vpack.c.bf16 %v214, %v210
  %v219 = vpack.c.bf16 %v215, %v211
  %v220 = vpack.c.bf16 %v216, %v212
  %221 = vst [vmem:[#allocation2 + $0x40] sm:$0xff] %v217
  %222 = vst [vmem:[#allocation2 + $0x48] sm:$0xff] %v218
  %223 = vst [vmem:[#allocation2 + $0x50] sm:$0xff] %v219
  %224 = vst [vmem:[#allocation2 + $0x58] sm:$0xff] %v220
  %225 = vrot.lane.b32.xlu0 %v24, 1
  %v226 = vpop.permute.xlu0 %225
  %227 = vrot.lane.b32.xlu0 %v28, 1
  %v228 = vpop.permute.xlu0 %227
  %229 = vrot.lane.b32.xlu0 %v25, 1
  %v230 = vpop.permute.xlu0 %229
  %231 = vrot.lane.b32.xlu0 %v29, 1
  %v232 = vpop.permute.xlu0 %231
  %233 = vrot.lane.b32.xlu0 %v26, 1
  %v234 = vpop.permute.xlu0 %233
  %235 = vrot.lane.b32.xlu0 %v30, 1
  %v236 = vpop.permute.xlu0 %235
  %237 = vrot.lane.b32.xlu0 %v27, 1
  %v238 = vpop.permute.xlu0 %237
  %239 = vrot.lane.b32.xlu0 %v31, 1
  %v240 = vpop.permute.xlu0 %239
  %vm241 = vcmp.lt.s32.totalorder %v49, 1
  %v242 = vsel %vm241, %v234, %v238
  %v243 = vsel %vm241, %v236, %v240
  %v244 = vsel %vm241, %v230, %v234
  %v245 = vsel %vm241, %v232, %v236
  %v246 = vsel %vm241, %v226, %v230
  %v247 = vsel %vm241, %v228, %v232
  %v248 = vsel %vm241, %v238, %v226
  %v249 = vsel %vm241, %v240, %v228
  %s250 = scalar_lea.vmem %s1, 3
  %v251 = vld [vmem:[%s250] ss:$8 sm:$0xf]
  %v253 = vlaneseq
  %v254 = vshrl.u32 %v253, 7
  %v255 = vsub.s32 0, %v254
  %v256 = vrot.slane %v251, %v255
  %v257 = vlaneseq
  %v258 = vshrl.u32 %v257, 7
  %v259 = vsub.s32 1, %v258
  %v260 = vrot.slane %v251, %v259
  %v261 = vlaneseq
  %v262 = vshrl.u32 %v261, 7
  %v263 = vsub.s32 2, %v262
  %v264 = vrot.slane %v251, %v263
  %v265 = vlaneseq
  %v266 = vshrl.u32 %v265, 7
  %v267 = vsub.s32 3, %v266
  %v268 = vrot.slane %v251, %v267
  %v273 = vmul.f32 %v248, %v256
  %v274 = vmul.f32 %v246, %v260
  %v275 = vmul.f32 %v244, %v264
  %v276 = vmul.f32 %v242, %v268
  %v277 = vmul.f32 %v249, %v256
  %v278 = vmul.f32 %v247, %v260
  %v279 = vmul.f32 %v245, %v264
  %v280 = vmul.f32 %v243, %v268
  %v281 = vpack.c.bf16 %v277, %v273
  %v282 = vpack.c.bf16 %v278, %v274
  %v283 = vpack.c.bf16 %v279, %v275
  %v284 = vpack.c.bf16 %v280, %v276
  %285 = vst [vmem:[#allocation2 + $0x60] sm:$0xff] %v281
  %286 = vst [vmem:[#allocation2 + $0x68] sm:$0xff] %v282
  %287 = vst [vmem:[#allocation2 + $0x70] sm:$0xff] %v283
  %288 = vst [vmem:[#allocation2 + $0x78] sm:$0xff] %v284
  %v289 = vpack.c.bf16 %v28, %v24
  %v290 = vpack.c.bf16 %v29, %v25
  %v291 = vpack.c.bf16 %v30, %v26
  %v292 = vpack.c.bf16 %v31, %v27
  %293 = vst [vmem:[#allocation2 + $0x80] sm:$0xff] %v289
  %294 = vst [vmem:[#allocation2 + $0x88] sm:$0xff] %v290
  %295 = vst [vmem:[#allocation2 + $0x90] sm:$0xff] %v291
  %296 = vst [vmem:[#allocation2 + $0x98] sm:$0xff] %v292
  %297 = vrot.lane.b32.xlu0 %v24, 127
  %v298 = vpop.permute.xlu0 %297
  %299 = vrot.lane.b32.xlu0 %v28, 127
  %v300 = vpop.permute.xlu0 %299
  %301 = vrot.lane.b32.xlu0 %v25, 127
  %v302 = vpop.permute.xlu0 %301
  %303 = vrot.lane.b32.xlu0 %v29, 127
  %v304 = vpop.permute.xlu0 %303
  %305 = vrot.lane.b32.xlu0 %v26, 127
  %v306 = vpop.permute.xlu0 %305
  %307 = vrot.lane.b32.xlu0 %v30, 127
  %v308 = vpop.permute.xlu0 %307
  %309 = vrot.lane.b32.xlu0 %v27, 127
  %v310 = vpop.permute.xlu0 %309
  %311 = vrot.lane.b32.xlu0 %v31, 127
  %v312 = vpop.permute.xlu0 %311
  %vm313 = vcmp.lt.s32.totalorder %v49, 127
  %v314 = vsel %vm313, %v306, %v310
  %v315 = vsel %vm313, %v308, %v312
  %v316 = vsel %vm313, %v302, %v306
  %v317 = vsel %vm313, %v304, %v308
  %v318 = vsel %vm313, %v298, %v302
  %v319 = vsel %vm313, %v300, %v304
  %v320 = vsel %vm313, %v310, %v298
  %v321 = vsel %vm313, %v312, %v300
  %s322 = scalar_lea.vmem %s1, 5
  %v323 = vld [vmem:[%s322] ss:$8 sm:$0xf]
  %v325 = vlaneseq
  %v326 = vshrl.u32 %v325, 7
  %v327 = vsub.s32 0, %v326
  %v328 = vrot.slane %v323, %v327
  %v329 = vlaneseq
  %v330 = vshrl.u32 %v329, 7
  %v331 = vsub.s32 1, %v330
  %v332 = vrot.slane %v323, %v331
  %v333 = vlaneseq
  %v334 = vshrl.u32 %v333, 7
  %v335 = vsub.s32 2, %v334
  %v336 = vrot.slane %v323, %v335
  %v337 = vlaneseq
  %v338 = vshrl.u32 %v337, 7
  %v339 = vsub.s32 3, %v338
  %v340 = vrot.slane %v323, %v339
  %v345 = vmul.f32 %v318, %v328
  %v346 = vmul.f32 %v316, %v332
  %v347 = vmul.f32 %v314, %v336
  %v348 = vmul.f32 %v320, %v340
  %v349 = vmul.f32 %v319, %v328
  %v350 = vmul.f32 %v317, %v332
  %v351 = vmul.f32 %v315, %v336
  %v352 = vmul.f32 %v321, %v340
  %v353 = vpack.c.bf16 %v349, %v345
  %v354 = vpack.c.bf16 %v350, %v346
  %v355 = vpack.c.bf16 %v351, %v347
  %v356 = vpack.c.bf16 %v352, %v348
  %357 = vst [vmem:[#allocation2 + $0xa0] sm:$0xff] %v353
  %358 = vst [vmem:[#allocation2 + $0xa8] sm:$0xff] %v354
  %359 = vst [vmem:[#allocation2 + $0xb0] sm:$0xff] %v355
  %360 = vst [vmem:[#allocation2 + $0xb8] sm:$0xff] %v356
  %361 = vrot.lane.b32.xlu0 %v24, 113
  %v362 = vpop.permute.xlu0 %361
  %363 = vrot.lane.b32.xlu0 %v28, 113
  %v364 = vpop.permute.xlu0 %363
  %365 = vrot.lane.b32.xlu0 %v25, 113
  %v366 = vpop.permute.xlu0 %365
  %367 = vrot.lane.b32.xlu0 %v29, 113
  %v368 = vpop.permute.xlu0 %367
  %369 = vrot.lane.b32.xlu0 %v26, 113
  %v370 = vpop.permute.xlu0 %369
  %371 = vrot.lane.b32.xlu0 %v30, 113
  %v372 = vpop.permute.xlu0 %371
  %373 = vrot.lane.b32.xlu0 %v27, 113
  %v374 = vpop.permute.xlu0 %373
  %375 = vrot.lane.b32.xlu0 %v31, 113
  %v376 = vpop.permute.xlu0 %375
  %vm377 = vcmp.lt.s32.totalorder %v49, 113
  %v378 = vsel %vm377, %v370, %v374
  %v379 = vsel %vm377, %v372, %v376
  %v380 = vsel %vm377, %v366, %v370
  %v381 = vsel %vm377, %v368, %v372
  %v382 = vsel %vm377, %v362, %v366
  %v383 = vsel %vm377, %v364, %v368
  %v384 = vsel %vm377, %v374, %v362
  %v385 = vsel %vm377, %v376, %v364
  %s386 = scalar_lea.vmem %s1, 6
  %v387 = vld [vmem:[%s386] ss:$8 sm:$0xf]
  %v389 = vlaneseq
  %v390 = vshrl.u32 %v389, 7
  %v391 = vsub.s32 0, %v390
  %v392 = vrot.slane %v387, %v391
  %v393 = vlaneseq
  %v394 = vshrl.u32 %v393, 7
  %v395 = vsub.s32 1, %v394
  %v396 = vrot.slane %v387, %v395
  %v397 = vlaneseq
  %v398 = vshrl.u32 %v397, 7
  %v399 = vsub.s32 2, %v398
  %v400 = vrot.slane %v387, %v399
  %v401 = vlaneseq
  %v402 = vshrl.u32 %v401, 7
  %v403 = vsub.s32 3, %v402
  %v404 = vrot.slane %v387, %v403
  %v409 = vmul.f32 %v382, %v392
  %v410 = vmul.f32 %v380, %v396
  %v411 = vmul.f32 %v378, %v400
  %v412 = vmul.f32 %v384, %v404
  %v413 = vmul.f32 %v383, %v392
  %v414 = vmul.f32 %v381, %v396
  %v415 = vmul.f32 %v379, %v400
  %v416 = vmul.f32 %v385, %v404
  %v417 = vpack.c.bf16 %v413, %v409
  %v418 = vpack.c.bf16 %v414, %v410
  %v419 = vpack.c.bf16 %v415, %v411
  %v420 = vpack.c.bf16 %v416, %v412
  %421 = vst [vmem:[#allocation2 + $0xc0] sm:$0xff] %v417
  %422 = vst [vmem:[#allocation2 + $0xc8] sm:$0xff] %v418
  %423 = vst [vmem:[#allocation2 + $0xd0] sm:$0xff] %v419
  %424 = vst [vmem:[#allocation2 + $0xd8] sm:$0xff] %v420
  %425 = vrot.lane.b32.xlu0 %v24, 112
  %v426 = vpop.permute.xlu0 %425
  %427 = vrot.lane.b32.xlu0 %v28, 112
  %v428 = vpop.permute.xlu0 %427
  %429 = vrot.lane.b32.xlu0 %v25, 112
  %v430 = vpop.permute.xlu0 %429
  %431 = vrot.lane.b32.xlu0 %v29, 112
  %v432 = vpop.permute.xlu0 %431
  %433 = vrot.lane.b32.xlu0 %v26, 112
  %v434 = vpop.permute.xlu0 %433
  %435 = vrot.lane.b32.xlu0 %v30, 112
  %v436 = vpop.permute.xlu0 %435
  %437 = vrot.lane.b32.xlu0 %v27, 112
  %v438 = vpop.permute.xlu0 %437
  %439 = vrot.lane.b32.xlu0 %v31, 112
  %v440 = vpop.permute.xlu0 %439
  %vm441 = vcmp.lt.s32.totalorder %v49, 112
  %v442 = vsel %vm441, %v434, %v438
  %v443 = vsel %vm441, %v436, %v440
  %v444 = vsel %vm441, %v430, %v434
  %v445 = vsel %vm441, %v432, %v436
  %v446 = vsel %vm441, %v426, %v430
  %v447 = vsel %vm441, %v428, %v432
  %v448 = vsel %vm441, %v438, %v426
  %v449 = vsel %vm441, %v440, %v428
  %s450 = scalar_lea.vmem %s1, 7
  %v451 = vld [vmem:[%s450] ss:$8 sm:$0xf]
  %v453 = vlaneseq
  %v454 = vshrl.u32 %v453, 7
  %v455 = vsub.s32 0, %v454
  %v456 = vrot.slane %v451, %v455
  %v457 = vlaneseq
  %v458 = vshrl.u32 %v457, 7
  %v459 = vsub.s32 1, %v458
  %v460 = vrot.slane %v451, %v459
  %v461 = vlaneseq
  %v462 = vshrl.u32 %v461, 7
  %v463 = vsub.s32 2, %v462
  %v464 = vrot.slane %v451, %v463
  %v465 = vlaneseq
  %v466 = vshrl.u32 %v465, 7
  %v467 = vsub.s32 3, %v466
  %v468 = vrot.slane %v451, %v467
  %v473 = vmul.f32 %v446, %v456
  %v474 = vmul.f32 %v444, %v460
  %v475 = vmul.f32 %v442, %v464
  %v476 = vmul.f32 %v448, %v468
  %v477 = vmul.f32 %v447, %v456
  %v478 = vmul.f32 %v445, %v460
  %v479 = vmul.f32 %v443, %v464
  %v480 = vmul.f32 %v449, %v468
  %v481 = vpack.c.bf16 %v477, %v473
  %v482 = vpack.c.bf16 %v478, %v474
  %v483 = vpack.c.bf16 %v479, %v475
  %v484 = vpack.c.bf16 %v480, %v476
  %485 = vst [vmem:[#allocation2 + $0xe0] sm:$0xff] %v481
  %486 = vst [vmem:[#allocation2 + $0xe8] sm:$0xff] %v482
  %487 = vst [vmem:[#allocation2 + $0xf0] sm:$0xff] %v483
  %488 = vst [vmem:[#allocation2 + $0xf8] sm:$0xff] %v484
  %489 = vrot.lane.b32.xlu0 %v24, 111
  %v490 = vpop.permute.xlu0 %489
  %491 = vrot.lane.b32.xlu0 %v28, 111
  %v492 = vpop.permute.xlu0 %491
  %493 = vrot.lane.b32.xlu0 %v25, 111
  %v494 = vpop.permute.xlu0 %493
  %495 = vrot.lane.b32.xlu0 %v29, 111
  %v496 = vpop.permute.xlu0 %495
  %497 = vrot.lane.b32.xlu0 %v26, 111
  %v498 = vpop.permute.xlu0 %497
  %499 = vrot.lane.b32.xlu0 %v30, 111
  %v500 = vpop.permute.xlu0 %499
  %501 = vrot.lane.b32.xlu0 %v27, 111
  %v502 = vpop.permute.xlu0 %501
  %503 = vrot.lane.b32.xlu0 %v31, 111
  %v504 = vpop.permute.xlu0 %503
  %vm505 = vcmp.lt.s32.totalorder %v49, 111
  %v506 = vsel %vm505, %v498, %v502
  %v507 = vsel %vm505, %v500, %v504
  %v508 = vsel %vm505, %v494, %v498
  %v509 = vsel %vm505, %v496, %v500
  %v510 = vsel %vm505, %v490, %v494
  %v511 = vsel %vm505, %v492, %v496
  %v512 = vsel %vm505, %v502, %v490
  %v513 = vsel %vm505, %v504, %v492
  %s514 = scalar_lea.vmem %s1, 32
  %v515 = vld [vmem:[%s514] ss:$8 sm:$0xf]
  %v517 = vlaneseq
  %v518 = vshrl.u32 %v517, 7
  %v519 = vsub.s32 0, %v518
  %v520 = vrot.slane %v515, %v519
  %v521 = vlaneseq
  %v522 = vshrl.u32 %v521, 7
  %v523 = vsub.s32 1, %v522
  %v524 = vrot.slane %v515, %v523
  %v525 = vlaneseq
  %v526 = vshrl.u32 %v525, 7
  %v527 = vsub.s32 2, %v526
  %v528 = vrot.slane %v515, %v527
  %v529 = vlaneseq
  %v530 = vshrl.u32 %v529, 7
  %v531 = vsub.s32 3, %v530
  %v532 = vrot.slane %v515, %v531
  %v537 = vmul.f32 %v510, %v520
  %v538 = vmul.f32 %v508, %v524
  %v539 = vmul.f32 %v506, %v528
  %v540 = vmul.f32 %v512, %v532
  %v541 = vmul.f32 %v511, %v520
  %v542 = vmul.f32 %v509, %v524
  %v543 = vmul.f32 %v507, %v528
  %v544 = vmul.f32 %v513, %v532
  %v545 = vpack.c.bf16 %v541, %v537
  %v546 = vpack.c.bf16 %v542, %v538
  %v547 = vpack.c.bf16 %v543, %v539
  %v548 = vpack.c.bf16 %v544, %v540
  %549 = vst [vmem:[#allocation2 + $0x100] sm:$0xff] %v545
  %550 = vst [vmem:[#allocation2 + $0x108] sm:$0xff] %v546
  %551 = vst [vmem:[#allocation2 + $0x110] sm:$0xff] %v547
  %552 = vst [vmem:[#allocation2 + $0x118] sm:$0xff] %v548
  %v553 = vld [vmem:[%s2] sm:$0xff]
  %v554 = vld [vmem:[%s2 + $0x8] sm:$0xff]
  %v555 = vld [vmem:[#allocation2] sm:$0xff]
  %v556 = vld [vmem:[#allocation2 + $0x8] sm:$0xff]
  %v557 = vld [vmem:[#allocation2 + $0x10] sm:$0xff]
  %v558 = vld [vmem:[#allocation2 + $0x18] sm:$0xff]
  %v559 = vld [vmem:[#allocation2 + $0x20] sm:$0xff]
  %v560 = vld [vmem:[#allocation2 + $0x28] sm:$0xff]
  %v561 = vld [vmem:[#allocation2 + $0x30] sm:$0xff]
  %v562 = vld [vmem:[#allocation2 + $0x38] sm:$0xff]
  %v563 = vld [vmem:[#allocation2 + $0x40] sm:$0xff]
  %v564 = vld [vmem:[#allocation2 + $0x48] sm:$0xff]
  %v565 = vld [vmem:[#allocation2 + $0x50] sm:$0xff]
  %v566 = vld [vmem:[#allocation2 + $0x58] sm:$0xff]
  %v567 = vld [vmem:[#allocation2 + $0x60] sm:$0xff]
  %v568 = vld [vmem:[#allocation2 + $0x68] sm:$0xff]
  %v569 = vld [vmem:[#allocation2 + $0x70] sm:$0xff]
  %v570 = vld [vmem:[#allocation2 + $0x78] sm:$0xff]
  %v571 = vld [vmem:[#allocation2 + $0x80] sm:$0xff]
  %v572 = vld [vmem:[#allocation2 + $0x88] sm:$0xff]
  %v573 = vld [vmem:[#allocation2 + $0x90] sm:$0xff]
  %v574 = vld [vmem:[#allocation2 + $0x98] sm:$0xff]
  %v575 = vld [vmem:[#allocation2 + $0xa0] sm:$0xff]
  %v576 = vld [vmem:[#allocation2 + $0xa8] sm:$0xff]
  %v577 = vld [vmem:[#allocation2 + $0xb0] sm:$0xff]
  %v578 = vld [vmem:[#allocation2 + $0xb8] sm:$0xff]
  %v579 = vld [vmem:[#allocation2 + $0xc0] sm:$0xff]
  %v580 = vld [vmem:[#allocation2 + $0xc8] sm:$0xff]
  %v581 = vld [vmem:[#allocation2 + $0xd0] sm:$0xff]
  %v582 = vld [vmem:[#allocation2 + $0xd8] sm:$0xff]
  %v583 = vld [vmem:[#allocation2 + $0xe0] sm:$0xff]
  %v584 = vld [vmem:[#allocation2 + $0xe8] sm:$0xff]
  %v585 = vld [vmem:[#allocation2 + $0xf0] sm:$0xff]
  %v586 = vld [vmem:[#allocation2 + $0xf8] sm:$0xff]
  %v587 = vld [vmem:[#allocation2 + $0x100] sm:$0xff]
  %v588 = vld [vmem:[#allocation2 + $0x108] sm:$0xff]
  %v589 = vld [vmem:[#allocation2 + $0x110] sm:$0xff]
  %v590 = vld [vmem:[#allocation2 + $0x118] sm:$0xff]
  %v591 = vld [vmem:[%s3] sm:$0xff]
  %v592 = vld [vmem:[%s3 + $0x8] sm:$0xff]
  %594 = vset.pattern.permute.xlu0 0
  %595 = vperm.xlu0 %594, %v591
  %v596 = vpop.permute.xlu0 %595
  %599 = vset.pattern.permute.xlu0 0
  %600 = vperm.xlu0 %599, %v592
  %v601 = vpop.permute.xlu0 %600
  %v605 = vunpack.c.l.b16 %v553
  %v606 = vunpack.c.h.b16 %v553
  %v607 = vunpack.c.l.b16 %v554
  %v608 = vunpack.c.h.b16 %v554
  %v609 = vpack.c.b16 %v607, %v605
  %v610 = vpack.c.b16 %v608, %v606
  %vm612 = vcmask 130048
  %v614 = vsel %vm612, %v610, 0
  %616 = vmatprep.subr.bf16.mxu0 %v556
  %617 = vmatpush1.bf16.msra.mxu0 %v555
  %618 = vmatprep.subr.bf16.mxu0 %v560
  %619 = vmatpush1.bf16.msra.mxu0 %v559
  %620 = vmatprep.subr.bf16.mxu0 %v564
  %621 = vmatpush1.bf16.msra.mxu0 %v563
  %622 = vmatprep.subr.bf16.mxu0 %v568
  %623 = vmatpush1.bf16.msra.mxu0 %v567
  %624 = vmatprep.subr.bf16.mxu0 %v572
  %625 = vmatpush1.bf16.msra.mxu0 %v571
  %626 = vmatprep.subr.bf16.mxu0 %v576
  %627 = vmatpush1.bf16.msra.mxu0 %v575
  %628 = vmatprep.subr.bf16.mxu0 %v580
  %629 = vmatpush1.bf16.msra.mxu0 %v579
  %630 = vmatprep.subr.bf16.mxu0 %v584
  %631 = vmatpush1.bf16.msra.mxu0 %v583
  %632 = vmatprep.subr.bf16.mxu0 %v588
  %633 = vmatpush1.bf16.msra.mxu0 %v587
  %634 = vmatprep.subr.bf16.mxu0 0
  %635 = vmatpush1.bf16.msra.mxu0 0
  %636 = vmatprep.subr.bf16.mxu0 0
  %637 = vmatpush1.bf16.msra.mxu0 0
  %638 = vmatprep.subr.bf16.mxu0 0
  %639 = vmatpush1.bf16.msra.mxu0 0
  %640 = vmatprep.subr.bf16.mxu0 0
  %641 = vmatpush1.bf16.msra.mxu0 0
  %642 = vmatprep.subr.bf16.mxu0 0
  %643 = vmatpush1.bf16.msra.mxu0 0
  %644 = vmatprep.subr.bf16.mxu0 0
  %645 = vmatpush1.bf16.msra.mxu0 0
  %646 = vmatprep.subr.bf16.mxu0 0
  %647 = vmatpush1.bf16.msra.mxu0 0
  %648 = vmatprep.mubr.bf16.mxu0 %v614
  %649 = vmatmul.mubr.bf16.gmra.mrb[0].mxu0 %v609
  %v650 = vpop.f32.mrb[0].mxu0
  %v651 = vadd.f32 %v596, %v650
  %v652 = vpop.f32.mrb[0].mxu0
  %v653 = vadd.f32 %v596, %v652
  %v654 = vpop.f32.mrb[0].mxu0
  %v655 = vadd.f32 %v601, %v654
  %v656 = vpop.f32.mrb[0].mxu0
  %v657 = vadd.f32 %v601, %v656
  %658 = vdwg.mxu0
  %659 = vmatprep.subr.bf16.mxu0 %v558
  %660 = vmatpush1.bf16.msra.mxu0 %v557
  %661 = vmatprep.subr.bf16.mxu0 %v562
  %662 = vmatpush1.bf16.msra.mxu0 %v561
  %663 = vmatprep.subr.bf16.mxu0 %v566
  %664 = vmatpush1.bf16.msra.mxu0 %v565
  %665 = vmatprep.subr.bf16.mxu0 %v570
  %666 = vmatpush1.bf16.msra.mxu0 %v569
  %667 = vmatprep.subr.bf16.mxu0 %v574
  %668 = vmatpush1.bf16.msra.mxu0 %v573
  %669 = vmatprep.subr.bf16.mxu0 %v578
  %670 = vmatpush1.bf16.msra.mxu0 %v577
  %671 = vmatprep.subr.bf16.mxu0 %v582
  %672 = vmatpush1.bf16.msra.mxu0 %v581
  %673 = vmatprep.subr.bf16.mxu0 %v586
  %674 = vmatpush1.bf16.msra.mxu0 %v585
  %675 = vmatprep.subr.bf16.mxu0 %v590
  %676 = vmatpush1.bf16.msra.mxu0 %v589
  %677 = vmatprep.subr.bf16.mxu0 0
  %678 = vmatpush1.bf16.msra.mxu0 0
  %679 = vmatprep.subr.bf16.mxu0 0
  %680 = vmatpush1.bf16.msra.mxu0 0
  %681 = vmatprep.subr.bf16.mxu0 0
  %682 = vmatpush1.bf16.msra.mxu0 0
  %683 = vmatprep.subr.bf16.mxu0 0
  %684 = vmatpush1.bf16.msra.mxu0 0
  %685 = vmatprep.subr.bf16.mxu0 0
  %686 = vmatpush1.bf16.msra.mxu0 0
  %687 = vmatprep.subr.bf16.mxu0 0
  %688 = vmatpush1.bf16.msra.mxu0 0
  %689 = vmatprep.subr.bf16.mxu0 0
  %690 = vmatpush1.bf16.msra.mxu0 0
  %691 = vmatprep.mubr.bf16.mxu0 %v614
  %692 = vmatmul.mubr.bf16.gmra.mrb[0].mxu0 %v609
  %v693 = vpop.f32.mrb[0].mxu0
  %v694 = vadd.f32 %v596, %v693
  %v695 = vpop.f32.mrb[0].mxu0
  %v696 = vadd.f32 %v596, %v695
  %v697 = vpop.f32.mrb[0].mxu0
  %v698 = vadd.f32 %v601, %v697
  %v699 = vpop.f32.mrb[0].mxu0
  %v700 = vadd.f32 %v601, %v699
  %701 = vdwg.mxu0
  %v702 = vmax.f32 %v651, 0.0
  %v703 = vmax.f32 %v653, 0.0
  %v704 = vmax.f32 %v694, 0.0
  %v705 = vmax.f32 %v696, 0.0
  %v706 = vmax.f32 %v655, 0.0
  %v707 = vmax.f32 %v657, 0.0
  %v708 = vmax.f32 %v698, 0.0
  %v709 = vmax.f32 %v700, 0.0
  %710 = vrot.lane.b32.xlu0 %v702, 17
  %v711 = vpop.permute.xlu0 %710
  %712 = vrot.lane.b32.xlu0 %v706, 17
  %v713 = vpop.permute.xlu0 %712
  %714 = vrot.lane.b32.xlu0 %v703, 17
  %v715 = vpop.permute.xlu0 %714
  %716 = vrot.lane.b32.xlu0 %v707, 17
  %v717 = vpop.permute.xlu0 %716
  %718 = vrot.lane.b32.xlu0 %v704, 17
  %v719 = vpop.permute.xlu0 %718
  %720 = vrot.lane.b32.xlu0 %v708, 17
  %v721 = vpop.permute.xlu0 %720
  %722 = vrot.lane.b32.xlu0 %v705, 17
  %v723 = vpop.permute.xlu0 %722
  %724 = vrot.lane.b32.xlu0 %v709, 17
  %v725 = vpop.permute.xlu0 %724
  %v726 = vsel %vm50, %v719, %v723
  %v727 = vsel %vm50, %v721, %v725
  %v728 = vsel %vm50, %v715, %v719
  %v729 = vsel %vm50, %v717, %v721
  %v730 = vsel %vm50, %v711, %v715
  %v731 = vsel %vm50, %v713, %v717
  %v732 = vsel %vm50, %v723, %v711
  %v733 = vsel %vm50, %v725, %v713
  %v734 = vld [vmem:[%s1] ss:$8 sm:$0xf]
  %v736 = vlaneseq
  %v737 = vshrl.u32 %v736, 7
  %v738 = vsub.s32 0, %v737
  %v739 = vrot.slane %v734, %v738
  %v740 = vlaneseq
  %v741 = vshrl.u32 %v740, 7
  %v742 = vsub.s32 1, %v741
  %v743 = vrot.slane %v734, %v742
  %v744 = vlaneseq
  %v745 = vshrl.u32 %v744, 7
  %v746 = vsub.s32 2, %v745
  %v747 = vrot.slane %v734, %v746
  %v748 = vlaneseq
  %v749 = vshrl.u32 %v748, 7
  %v750 = vsub.s32 3, %v749
  %v751 = vrot.slane %v734, %v750
  %v756 = vmul.f32 %v732, %v739
  %v757 = vmul.f32 %v730, %v743
  %v758 = vmul.f32 %v728, %v747
  %v759 = vmul.f32 %v726, %v751
  %v760 = vmul.f32 %v733, %v739
  %v761 = vmul.f32 %v731, %v743
  %v762 = vmul.f32 %v729, %v747
  %v763 = vmul.f32 %v727, %v751
  %v764 = vpack.c.bf16 %v760, %v756
  %v765 = vpack.c.bf16 %v761, %v757
  %v766 = vpack.c.bf16 %v762, %v758
  %v767 = vpack.c.bf16 %v763, %v759
  %768 = vst [vmem:[#allocation2] sm:$0xff] %v764
  %769 = vst [vmem:[#allocation2 + $0x8] sm:$0xff] %v765
  %770 = vst [vmem:[#allocation2 + $0x10] sm:$0xff] %v766
  %771 = vst [vmem:[#allocation2 + $0x18] sm:$0xff] %v767
  %772 = vrot.lane.b32.xlu0 %v702, 16
  %v773 = vpop.permute.xlu0 %772
  %774 = vrot.lane.b32.xlu0 %v706, 16
  %v775 = vpop.permute.xlu0 %774
  %776 = vrot.lane.b32.xlu0 %v703, 16
  %v777 = vpop.permute.xlu0 %776
  %778 = vrot.lane.b32.xlu0 %v707, 16
  %v779 = vpop.permute.xlu0 %778
  %780 = vrot.lane.b32.xlu0 %v704, 16
  %v781 = vpop.permute.xlu0 %780
  %782 = vrot.lane.b32.xlu0 %v708, 16
  %v783 = vpop.permute.xlu0 %782
  %784 = vrot.lane.b32.xlu0 %v705, 16
  %v785 = vpop.permute.xlu0 %784
  %786 = vrot.lane.b32.xlu0 %v709, 16
  %v787 = vpop.permute.xlu0 %786
  %v788 = vsel %vm113, %v781, %v785
  %v789 = vsel %vm113, %v783, %v787
  %v790 = vsel %vm113, %v777, %v781
  %v791 = vsel %vm113, %v779, %v783
  %v792 = vsel %vm113, %v773, %v777
  %v793 = vsel %vm113, %v775, %v779
  %v794 = vsel %vm113, %v785, %v773
  %v795 = vsel %vm113, %v787, %v775
  %v796 = vld [vmem:[%s122] ss:$8 sm:$0xf]
  %v798 = vlaneseq
  %v799 = vshrl.u32 %v798, 7
  %v800 = vsub.s32 0, %v799
  %v801 = vrot.slane %v796, %v800
  %v802 = vlaneseq
  %v803 = vshrl.u32 %v802, 7
  %v804 = vsub.s32 1, %v803
  %v805 = vrot.slane %v796, %v804
  %v806 = vlaneseq
  %v807 = vshrl.u32 %v806, 7
  %v808 = vsub.s32 2, %v807
  %v809 = vrot.slane %v796, %v808
  %v810 = vlaneseq
  %v811 = vshrl.u32 %v810, 7
  %v812 = vsub.s32 3, %v811
  %v813 = vrot.slane %v796, %v812
  %v818 = vmul.f32 %v794, %v801
  %v819 = vmul.f32 %v792, %v805
  %v820 = vmul.f32 %v790, %v809
  %v821 = vmul.f32 %v788, %v813
  %v822 = vmul.f32 %v795, %v801
  %v823 = vmul.f32 %v793, %v805
  %v824 = vmul.f32 %v791, %v809
  %v825 = vmul.f32 %v789, %v813
  %v826 = vpack.c.bf16 %v822, %v818
  %v827 = vpack.c.bf16 %v823, %v819
  %v828 = vpack.c.bf16 %v824, %v820
  %v829 = vpack.c.bf16 %v825, %v821
  %830 = vst [vmem:[#allocation2 + $0x20] sm:$0xff] %v826
  %831 = vst [vmem:[#allocation2 + $0x28] sm:$0xff] %v827
  %832 = vst [vmem:[#allocation2 + $0x30] sm:$0xff] %v828
  %833 = vst [vmem:[#allocation2 + $0x38] sm:$0xff] %v829
  %834 = vrot.lane.b32.xlu0 %v702, 15
  %v835 = vpop.permute.xlu0 %834
  %836 = vrot.lane.b32.xlu0 %v706, 15
  %v837 = vpop.permute.xlu0 %836
  %838 = vrot.lane.b32.xlu0 %v703, 15
  %v839 = vpop.permute.xlu0 %838
  %840 = vrot.lane.b32.xlu0 %v707, 15
  %v841 = vpop.permute.xlu0 %840
  %842 = vrot.lane.b32.xlu0 %v704, 15
  %v843 = vpop.permute.xlu0 %842
  %844 = vrot.lane.b32.xlu0 %v708, 15
  %v845 = vpop.permute.xlu0 %844
  %846 = vrot.lane.b32.xlu0 %v705, 15
  %v847 = vpop.permute.xlu0 %846
  %848 = vrot.lane.b32.xlu0 %v709, 15
  %v849 = vpop.permute.xlu0 %848
  %v850 = vsel %vm177, %v843, %v847
  %v851 = vsel %vm177, %v845, %v849
  %v852 = vsel %vm177, %v839, %v843
  %v853 = vsel %vm177, %v841, %v845
  %v854 = vsel %vm177, %v835, %v839
  %v855 = vsel %vm177, %v837, %v841
  %v856 = vsel %vm177, %v847, %v835
  %v857 = vsel %vm177, %v849, %v837
  %v858 = vld [vmem:[%s186] ss:$8 sm:$0xf]
  %v860 = vlaneseq
  %v861 = vshrl.u32 %v860, 7
  %v862 = vsub.s32 0, %v861
  %v863 = vrot.slane %v858, %v862
  %v864 = vlaneseq
  %v865 = vshrl.u32 %v864, 7
  %v866 = vsub.s32 1, %v865
  %v867 = vrot.slane %v858, %v866
  %v868 = vlaneseq
  %v869 = vshrl.u32 %v868, 7
  %v870 = vsub.s32 2, %v869
  %v871 = vrot.slane %v858, %v870
  %v872 = vlaneseq
  %v873 = vshrl.u32 %v872, 7
  %v874 = vsub.s32 3, %v873
  %v875 = vrot.slane %v858, %v874
  %v880 = vmul.f32 %v856, %v863
  %v881 = vmul.f32 %v854, %v867
  %v882 = vmul.f32 %v852, %v871
  %v883 = vmul.f32 %v850, %v875
  %v884 = vmul.f32 %v857, %v863
  %v885 = vmul.f32 %v855, %v867
  %v886 = vmul.f32 %v853, %v871
  %v887 = vmul.f32 %v851, %v875
  %v888 = vpack.c.bf16 %v884, %v880
  %v889 = vpack.c.bf16 %v885, %v881
  %v890 = vpack.c.bf16 %v886, %v882
  %v891 = vpack.c.bf16 %v887, %v883
  %892 = vst [vmem:[#allocation2 + $0x40] sm:$0xff] %v888
  %893 = vst [vmem:[#allocation2 + $0x48] sm:$0xff] %v889
  %894 = vst [vmem:[#allocation2 + $0x50] sm:$0xff] %v890
  %895 = vst [vmem:[#allocation2 + $0x58] sm:$0xff] %v891
  %896 = vrot.lane.b32.xlu0 %v702, 1
  %v897 = vpop.permute.xlu0 %896
  %898 = vrot.lane.b32.xlu0 %v706, 1
  %v899 = vpop.permute.xlu0 %898
  %900 = vrot.lane.b32.xlu0 %v703, 1
  %v901 = vpop.permute.xlu0 %900
  %902 = vrot.lane.b32.xlu0 %v707, 1
  %v903 = vpop.permute.xlu0 %902
  %904 = vrot.lane.b32.xlu0 %v704, 1
  %v905 = vpop.permute.xlu0 %904
  %906 = vrot.lane.b32.xlu0 %v708, 1
  %v907 = vpop.permute.xlu0 %906
  %908 = vrot.lane.b32.xlu0 %v705, 1
  %v909 = vpop.permute.xlu0 %908
  %910 = vrot.lane.b32.xlu0 %v709, 1
  %v911 = vpop.permute.xlu0 %910
  %v912 = vsel %vm241, %v905, %v909
  %v913 = vsel %vm241, %v907, %v911
  %v914 = vsel %vm241, %v901, %v905
  %v915 = vsel %vm241, %v903, %v907
  %v916 = vsel %vm241, %v897, %v901
  %v917 = vsel %vm241, %v899, %v903
  %v918 = vsel %vm241, %v909, %v897
  %v919 = vsel %vm241, %v911, %v899
  %v920 = vld [vmem:[%s250] ss:$8 sm:$0xf]
  %v922 = vlaneseq
  %v923 = vshrl.u32 %v922, 7
  %v924 = vsub.s32 0, %v923
  %v925 = vrot.slane %v920, %v924
  %v926 = vlaneseq
  %v927 = vshrl.u32 %v926, 7
  %v928 = vsub.s32 1, %v927
  %v929 = vrot.slane %v920, %v928
  %v930 = vlaneseq
  %v931 = vshrl.u32 %v930, 7
  %v932 = vsub.s32 2, %v931
  %v933 = vrot.slane %v920, %v932
  %v934 = vlaneseq
  %v935 = vshrl.u32 %v934, 7
  %v936 = vsub.s32 3, %v935
  %v937 = vrot.slane %v920, %v936
  %v942 = vmul.f32 %v918, %v925
  %v943 = vmul.f32 %v916, %v929
  %v944 = vmul.f32 %v914, %v933
  %v945 = vmul.f32 %v912, %v937
  %v946 = vmul.f32 %v919, %v925
  %v947 = vmul.f32 %v917, %v929
  %v948 = vmul.f32 %v915, %v933
  %v949 = vmul.f32 %v913, %v937
  %v950 = vpack.c.bf16 %v946, %v942
  %v951 = vpack.c.bf16 %v947, %v943
  %v952 = vpack.c.bf16 %v948, %v944
  %v953 = vpack.c.bf16 %v949, %v945
  %954 = vst [vmem:[#allocation2 + $0x60] sm:$0xff] %v950
  %955 = vst [vmem:[#allocation2 + $0x68] sm:$0xff] %v951
  %956 = vst [vmem:[#allocation2 + $0x70] sm:$0xff] %v952
  %957 = vst [vmem:[#allocation2 + $0x78] sm:$0xff] %v953
  %v958 = vpack.c.bf16 %v706, %v702
  %v959 = vpack.c.bf16 %v707, %v703
  %v960 = vpack.c.bf16 %v708, %v704
  %v961 = vpack.c.bf16 %v709, %v705
  %962 = vst [vmem:[#allocation2 + $0x80] sm:$0xff] %v958
  %963 = vst [vmem:[#allocation2 + $0x88] sm:$0xff] %v959
  %964 = vst [vmem:[#allocation2 + $0x90] sm:$0xff] %v960
  %965 = vst [vmem:[#allocation2 + $0x98] sm:$0xff] %v961
  %966 = vrot.lane.b32.xlu0 %v702, 127
  %v967 = vpop.permute.xlu0 %966
  %968 = vrot.lane.b32.xlu0 %v706, 127
  %v969 = vpop.permute.xlu0 %968
  %970 = vrot.lane.b32.xlu0 %v703, 127
  %v971 = vpop.permute.xlu0 %970
  %972 = vrot.lane.b32.xlu0 %v707, 127
  %v973 = vpop.permute.xlu0 %972
  %974 = vrot.lane.b32.xlu0 %v704, 127
  %v975 = vpop.permute.xlu0 %974
  %976 = vrot.lane.b32.xlu0 %v708, 127
  %v977 = vpop.permute.xlu0 %976
  %978 = vrot.lane.b32.xlu0 %v705, 127
  %v979 = vpop.permute.xlu0 %978
  %980 = vrot.lane.b32.xlu0 %v709, 127
  %v981 = vpop.permute.xlu0 %980
  %v982 = vsel %vm313, %v975, %v979
  %v983 = vsel %vm313, %v977, %v981
  %v984 = vsel %vm313, %v971, %v975
  %v985 = vsel %vm313, %v973, %v977
  %v986 = vsel %vm313, %v967, %v971
  %v987 = vsel %vm313, %v969, %v973
  %v988 = vsel %vm313, %v979, %v967
  %v989 = vsel %vm313, %v981, %v969
  %v990 = vld [vmem:[%s322] ss:$8 sm:$0xf]
  %v992 = vlaneseq
  %v993 = vshrl.u32 %v992, 7
  %v994 = vsub.s32 0, %v993
  %v995 = vrot.slane %v990, %v994
  %v996 = vlaneseq
  %v997 = vshrl.u32 %v996, 7
  %v998 = vsub.s32 1, %v997
  %v999 = vrot.slane %v990, %v998
  %v1000 = vlaneseq
  %v1001 = vshrl.u32 %v1000, 7
  %v1002 = vsub.s32 2, %v1001
  %v1003 = vrot.slane %v990, %v1002
  %v1004 = vlaneseq
  %v1005 = vshrl.u32 %v1004, 7
  %v1006 = vsub.s32 3, %v1005
  %v1007 = vrot.slane %v990, %v1006
  %v1012 = vmul.f32 %v986, %v995
  %v1013 = vmul.f32 %v984, %v999
  %v1014 = vmul.f32 %v982, %v1003
  %v1015 = vmul.f32 %v988, %v1007
  %v1016 = vmul.f32 %v987, %v995
  %v1017 = vmul.f32 %v985, %v999
  %v1018 = vmul.f32 %v983, %v1003
  %v1019 = vmul.f32 %v989, %v1007
  %v1020 = vpack.c.bf16 %v1016, %v1012
  %v1021 = vpack.c.bf16 %v1017, %v1013
  %v1022 = vpack.c.bf16 %v1018, %v1014
  %v1023 = vpack.c.bf16 %v1019, %v1015
  %1024 = vst [vmem:[#allocation2 + $0xa0] sm:$0xff] %v1020
  %1025 = vst [vmem:[#allocation2 + $0xa8] sm:$0xff] %v1021
  %1026 = vst [vmem:[#allocation2 + $0xb0] sm:$0xff] %v1022
  %1027 = vst [vmem:[#allocation2 + $0xb8] sm:$0xff] %v1023
  %1028 = vrot.lane.b32.xlu0 %v702, 113
  %v1029 = vpop.permute.xlu0 %1028
  %1030 = vrot.lane.b32.xlu0 %v706, 113
  %v1031 = vpop.permute.xlu0 %1030
  %1032 = vrot.lane.b32.xlu0 %v703, 113
  %v1033 = vpop.permute.xlu0 %1032
  %1034 = vrot.lane.b32.xlu0 %v707, 113
  %v1035 = vpop.permute.xlu0 %1034
  %1036 = vrot.lane.b32.xlu0 %v704, 113
  %v1037 = vpop.permute.xlu0 %1036
  %1038 = vrot.lane.b32.xlu0 %v708, 113
  %v1039 = vpop.permute.xlu0 %1038
  %1040 = vrot.lane.b32.xlu0 %v705, 113
  %v1041 = vpop.permute.xlu0 %1040
  %1042 = vrot.lane.b32.xlu0 %v709, 113
  %v1043 = vpop.permute.xlu0 %1042
  %v1044 = vsel %vm377, %v1037, %v1041
  %v1045 = vsel %vm377, %v1039, %v1043
  %v1046 = vsel %vm377, %v1033, %v1037
  %v1047 = vsel %vm377, %v1035, %v1039
  %v1048 = vsel %vm377, %v1029, %v1033
  %v1049 = vsel %vm377, %v1031, %v1035
  %v1050 = vsel %vm377, %v1041, %v1029
  %v1051 = vsel %vm377, %v1043, %v1031
  %v1052 = vld [vmem:[%s386] ss:$8 sm:$0xf]
  %v1054 = vlaneseq
  %v1055 = vshrl.u32 %v1054, 7
  %v1056 = vsub.s32 0, %v1055
  %v1057 = vrot.slane %v1052, %v1056
  %v1058 = vlaneseq
  %v1059 = vshrl.u32 %v1058, 7
  %v1060 = vsub.s32 1, %v1059
  %v1061 = vrot.slane %v1052, %v1060
  %v1062 = vlaneseq
  %v1063 = vshrl.u32 %v1062, 7
  %v1064 = vsub.s32 2, %v1063
  %v1065 = vrot.slane %v1052, %v1064
  %v1066 = vlaneseq
  %v1067 = vshrl.u32 %v1066, 7
  %v1068 = vsub.s32 3, %v1067
  %v1069 = vrot.slane %v1052, %v1068
  %v1074 = vmul.f32 %v1048, %v1057
  %v1075 = vmul.f32 %v1046, %v1061
  %v1076 = vmul.f32 %v1044, %v1065
  %v1077 = vmul.f32 %v1050, %v1069
  %v1078 = vmul.f32 %v1049, %v1057
  %v1079 = vmul.f32 %v1047, %v1061
  %v1080 = vmul.f32 %v1045, %v1065
  %v1081 = vmul.f32 %v1051, %v1069
  %v1082 = vpack.c.bf16 %v1078, %v1074
  %v1083 = vpack.c.bf16 %v1079, %v1075
  %v1084 = vpack.c.bf16 %v1080, %v1076
  %v1085 = vpack.c.bf16 %v1081, %v1077
  %1086 = vst [vmem:[#allocation2 + $0xc0] sm:$0xff] %v1082
  %1087 = vst [vmem:[#allocation2 + $0xc8] sm:$0xff] %v1083
  %1088 = vst [vmem:[#allocation2 + $0xd0] sm:$0xff] %v1084
  %1089 = vst [vmem:[#allocation2 + $0xd8] sm:$0xff] %v1085
  %1090 = vrot.lane.b32.xlu0 %v702, 112
  %v1091 = vpop.permute.xlu0 %1090
  %1092 = vrot.lane.b32.xlu0 %v706, 112
  %v1093 = vpop.permute.xlu0 %1092
  %1094 = vrot.lane.b32.xlu0 %v703, 112
  %v1095 = vpop.permute.xlu0 %1094
  %1096 = vrot.lane.b32.xlu0 %v707, 112
  %v1097 = vpop.permute.xlu0 %1096
  %1098 = vrot.lane.b32.xlu0 %v704, 112
  %v1099 = vpop.permute.xlu0 %1098
  %1100 = vrot.lane.b32.xlu0 %v708, 112
  %v1101 = vpop.permute.xlu0 %1100
  %1102 = vrot.lane.b32.xlu0 %v705, 112
  %v1103 = vpop.permute.xlu0 %1102
  %1104 = vrot.lane.b32.xlu0 %v709, 112
  %v1105 = vpop.permute.xlu0 %1104
  %v1106 = vsel %vm441, %v1099, %v1103
  %v1107 = vsel %vm441, %v1101, %v1105
  %v1108 = vsel %vm441, %v1095, %v1099
  %v1109 = vsel %vm441, %v1097, %v1101
  %v1110 = vsel %vm441, %v1091, %v1095
  %v1111 = vsel %vm441, %v1093, %v1097
  %v1112 = vsel %vm441, %v1103, %v1091
  %v1113 = vsel %vm441, %v1105, %v1093
  %v1114 = vld [vmem:[%s450] ss:$8 sm:$0xf]
  %v1116 = vlaneseq
  %v1117 = vshrl.u32 %v1116, 7
  %v1118 = vsub.s32 0, %v1117
  %v1119 = vrot.slane %v1114, %v1118
  %v1120 = vlaneseq
  %v1121 = vshrl.u32 %v1120, 7
  %v1122 = vsub.s32 1, %v1121
  %v1123 = vrot.slane %v1114, %v1122
  %v1124 = vlaneseq
  %v1125 = vshrl.u32 %v1124, 7
  %v1126 = vsub.s32 2, %v1125
  %v1127 = vrot.slane %v1114, %v1126
  %v1128 = vlaneseq
  %v1129 = vshrl.u32 %v1128, 7
  %v1130 = vsub.s32 3, %v1129
  %v1131 = vrot.slane %v1114, %v1130
  %v1136 = vmul.f32 %v1110, %v1119
  %v1137 = vmul.f32 %v1108, %v1123
  %v1138 = vmul.f32 %v1106, %v1127
  %v1139 = vmul.f32 %v1112, %v1131
  %v1140 = vmul.f32 %v1111, %v1119
  %v1141 = vmul.f32 %v1109, %v1123
  %v1142 = vmul.f32 %v1107, %v1127
  %v1143 = vmul.f32 %v1113, %v1131
  %v1144 = vpack.c.bf16 %v1140, %v1136
  %v1145 = vpack.c.bf16 %v1141, %v1137
  %v1146 = vpack.c.bf16 %v1142, %v1138
  %v1147 = vpack.c.bf16 %v1143, %v1139
  %1148 = vst [vmem:[#allocation2 + $0xe0] sm:$0xff] %v1144
  %1149 = vst [vmem:[#allocation2 + $0xe8] sm:$0xff] %v1145
  %1150 = vst [vmem:[#allocation2 + $0xf0] sm:$0xff] %v1146
  %1151 = vst [vmem:[#allocation2 + $0xf8] sm:$0xff] %v1147
  %1152 = vrot.lane.b32.xlu0 %v702, 111
  %v1153 = vpop.permute.xlu0 %1152
  %1154 = vrot.lane.b32.xlu0 %v706, 111
  %v1155 = vpop.permute.xlu0 %1154
  %1156 = vrot.lane.b32.xlu0 %v703, 111
  %v1157 = vpop.permute.xlu0 %1156
  %1158 = vrot.lane.b32.xlu0 %v707, 111
  %v1159 = vpop.permute.xlu0 %1158
  %1160 = vrot.lane.b32.xlu0 %v704, 111
  %v1161 = vpop.permute.xlu0 %1160
  %1162 = vrot.lane.b32.xlu0 %v708, 111
  %v1163 = vpop.permute.xlu0 %1162
  %1164 = vrot.lane.b32.xlu0 %v705, 111
  %v1165 = vpop.permute.xlu0 %1164
  %1166 = vrot.lane.b32.xlu0 %v709, 111
  %v1167 = vpop.permute.xlu0 %1166
  %v1168 = vsel %vm505, %v1161, %v1165
  %v1169 = vsel %vm505, %v1163, %v1167
  %v1170 = vsel %vm505, %v1157, %v1161
  %v1171 = vsel %vm505, %v1159, %v1163
  %v1172 = vsel %vm505, %v1153, %v1157
  %v1173 = vsel %vm505, %v1155, %v1159
  %v1174 = vsel %vm505, %v1165, %v1153
  %v1175 = vsel %vm505, %v1167, %v1155
  %v1176 = vld [vmem:[%s514] ss:$8 sm:$0xf]
  %v1178 = vlaneseq
  %v1179 = vshrl.u32 %v1178, 7
  %v1180 = vsub.s32 0, %v1179
  %v1181 = vrot.slane %v1176, %v1180
  %v1182 = vlaneseq
  %v1183 = vshrl.u32 %v1182, 7
  %v1184 = vsub.s32 1, %v1183
  %v1185 = vrot.slane %v1176, %v1184
  %v1186 = vlaneseq
  %v1187 = vshrl.u32 %v1186, 7
  %v1188 = vsub.s32 2, %v1187
  %v1189 = vrot.slane %v1176, %v1188
  %v1190 = vlaneseq
  %v1191 = vshrl.u32 %v1190, 7
  %v1192 = vsub.s32 3, %v1191
  %v1193 = vrot.slane %v1176, %v1192
  %v1198 = vmul.f32 %v1172, %v1181
  %v1199 = vmul.f32 %v1170, %v1185
  %v1200 = vmul.f32 %v1168, %v1189
  %v1201 = vmul.f32 %v1174, %v1193
  %v1202 = vmul.f32 %v1173, %v1181
  %v1203 = vmul.f32 %v1171, %v1185
  %v1204 = vmul.f32 %v1169, %v1189
  %v1205 = vmul.f32 %v1175, %v1193
  %v1206 = vpack.c.bf16 %v1202, %v1198
  %v1207 = vpack.c.bf16 %v1203, %v1199
  %v1208 = vpack.c.bf16 %v1204, %v1200
  %v1209 = vpack.c.bf16 %v1205, %v1201
  %1210 = vst [vmem:[#allocation2 + $0x100] sm:$0xff] %v1206
  %1211 = vst [vmem:[#allocation2 + $0x108] sm:$0xff] %v1207
  %1212 = vst [vmem:[#allocation2 + $0x110] sm:$0xff] %v1208
  %1213 = vst [vmem:[#allocation2 + $0x118] sm:$0xff] %v1209
  %v1214 = vld [vmem:[%s4] sm:$0xff]
  %v1215 = vld [vmem:[%s4 + $0x8] sm:$0xff]
  %v1216 = vld [vmem:[#allocation2] sm:$0xff]
  %v1217 = vld [vmem:[#allocation2 + $0x8] sm:$0xff]
  %v1218 = vld [vmem:[#allocation2 + $0x10] sm:$0xff]
  %v1219 = vld [vmem:[#allocation2 + $0x18] sm:$0xff]
  %v1220 = vld [vmem:[#allocation2 + $0x20] sm:$0xff]
  %v1221 = vld [vmem:[#allocation2 + $0x28] sm:$0xff]
  %v1222 = vld [vmem:[#allocation2 + $0x30] sm:$0xff]
  %v1223 = vld [vmem:[#allocation2 + $0x38] sm:$0xff]
  %v1224 = vld [vmem:[#allocation2 + $0x40] sm:$0xff]
  %v1225 = vld [vmem:[#allocation2 + $0x48] sm:$0xff]
  %v1226 = vld [vmem:[#allocation2 + $0x50] sm:$0xff]
  %v1227 = vld [vmem:[#allocation2 + $0x58] sm:$0xff]
  %v1228 = vld [vmem:[#allocation2 + $0x60] sm:$0xff]
  %v1229 = vld [vmem:[#allocation2 + $0x68] sm:$0xff]
  %v1230 = vld [vmem:[#allocation2 + $0x70] sm:$0xff]
  %v1231 = vld [vmem:[#allocation2 + $0x78] sm:$0xff]
  %v1232 = vld [vmem:[#allocation2 + $0x80] sm:$0xff]
  %v1233 = vld [vmem:[#allocation2 + $0x88] sm:$0xff]
  %v1234 = vld [vmem:[#allocation2 + $0x90] sm:$0xff]
  %v1235 = vld [vmem:[#allocation2 + $0x98] sm:$0xff]
  %v1236 = vld [vmem:[#allocation2 + $0xa0] sm:$0xff]
  %v1237 = vld [vmem:[#allocation2 + $0xa8] sm:$0xff]
  %v1238 = vld [vmem:[#allocation2 + $0xb0] sm:$0xff]
  %v1239 = vld [vmem:[#allocation2 + $0xb8] sm:$0xff]
  %v1240 = vld [vmem:[#allocation2 + $0xc0] sm:$0xff]
  %v1241 = vld [vmem:[#allocation2 + $0xc8] sm:$0xff]
  %v1242 = vld [vmem:[#allocation2 + $0xd0] sm:$0xff]
  %v1243 = vld [vmem:[#allocation2 + $0xd8] sm:$0xff]
  %v1244 = vld [vmem:[#allocation2 + $0xe0] sm:$0xff]
  %v1245 = vld [vmem:[#allocation2 + $0xe8] sm:$0xff]
  %v1246 = vld [vmem:[#allocation2 + $0xf0] sm:$0xff]
  %v1247 = vld [vmem:[#allocation2 + $0xf8] sm:$0xff]
  %v1248 = vld [vmem:[#allocation2 + $0x100] sm:$0xff]
  %v1249 = vld [vmem:[#allocation2 + $0x108] sm:$0xff]
  %v1250 = vld [vmem:[#allocation2 + $0x110] sm:$0xff]
  %v1251 = vld [vmem:[#allocation2 + $0x118] sm:$0xff]
  %v1252 = vld [vmem:[%s5] sm:$0xff]
  %v1253 = vld [vmem:[%s5 + $0x8] sm:$0xff]
  %1255 = vset.pattern.permute.xlu0 0
  %1256 = vperm.xlu0 %1255, %v1252
  %v1257 = vpop.permute.xlu0 %1256
  %1260 = vset.pattern.permute.xlu0 0
  %1261 = vperm.xlu0 %1260, %v1253
  %v1262 = vpop.permute.xlu0 %1261
  %v1266 = vunpack.c.l.b16 %v1214
  %v1267 = vunpack.c.h.b16 %v1214
  %v1268 = vunpack.c.l.b16 %v1215
  %v1269 = vunpack.c.h.b16 %v1215
  %v1270 = vpack.c.b16 %v1268, %v1266
  %v1271 = vpack.c.b16 %v1269, %v1267
  %v1274 = vsel %vm612, %v1271, 0
  %1276 = vmatprep.subr.bf16.mxu0 %v1217
  %1277 = vmatpush1.bf16.msra.mxu0 %v1216
  %1278 = vmatprep.subr.bf16.mxu0 %v1221
  %1279 = vmatpush1.bf16.msra.mxu0 %v1220
  %1280 = vmatprep.subr.bf16.mxu0 %v1225
  %1281 = vmatpush1.bf16.msra.mxu0 %v1224
  %1282 = vmatprep.subr.bf16.mxu0 %v1229
  %1283 = vmatpush1.bf16.msra.mxu0 %v1228
  %1284 = vmatprep.subr.bf16.mxu0 %v1233
  %1285 = vmatpush1.bf16.msra.mxu0 %v1232
  %1286 = vmatprep.subr.bf16.mxu0 %v1237
  %1287 = vmatpush1.bf16.msra.mxu0 %v1236
  %1288 = vmatprep.subr.bf16.mxu0 %v1241
  %1289 = vmatpush1.bf16.msra.mxu0 %v1240
  %1290 = vmatprep.subr.bf16.mxu0 %v1245
  %1291 = vmatpush1.bf16.msra.mxu0 %v1244
  %1292 = vmatprep.subr.bf16.mxu0 %v1249
  %1293 = vmatpush1.bf16.msra.mxu0 %v1248
  %1294 = vmatprep.subr.bf16.mxu0 0
  %1295 = vmatpush1.bf16.msra.mxu0 0
  %1296 = vmatprep.subr.bf16.mxu0 0
  %1297 = vmatpush1.bf16.msra.mxu0 0
  %1298 = vmatprep.subr.bf16.mxu0 0
  %1299 = vmatpush1.bf16.msra.mxu0 0
  %1300 = vmatprep.subr.bf16.mxu0 0
  %1301 = vmatpush1.bf16.msra.mxu0 0
  %1302 = vmatprep.subr.bf16.mxu0 0
  %1303 = vmatpush1.bf16.msra.mxu0 0
  %1304 = vmatprep.subr.bf16.mxu0 0
  %1305 = vmatpush1.bf16.msra.mxu0 0
  %1306 = vmatprep.subr.bf16.mxu0 0
  %1307 = vmatpush1.bf16.msra.mxu0 0
  %1308 = vmatprep.mubr.bf16.mxu0 %v1274
  %1309 = vmatmul.mubr.bf16.gmra.mrb[0].mxu0 %v1270
  %v1310 = vpop.f32.mrb[0].mxu0
  %v1311 = vadd.f32 %v1257, %v1310
  %v1312 = vpop.f32.mrb[0].mxu0
  %v1313 = vadd.f32 %v1257, %v1312
  %v1314 = vpop.f32.mrb[0].mxu0
  %v1315 = vadd.f32 %v1262, %v1314
  %v1316 = vpop.f32.mrb[0].mxu0
  %v1317 = vadd.f32 %v1262, %v1316
  %1318 = vdwg.mxu0
  %1319 = vmatprep.subr.bf16.mxu0 %v1219
  %1320 = vmatpush1.bf16.msra.mxu0 %v1218
  %1321 = vmatprep.subr.bf16.mxu0 %v1223
  %1322 = vmatpush1.bf16.msra.mxu0 %v1222
  %1323 = vmatprep.subr.bf16.mxu0 %v1227
  %1324 = vmatpush1.bf16.msra.mxu0 %v1226
  %1325 = vmatprep.subr.bf16.mxu0 %v1231
  %1326 = vmatpush1.bf16.msra.mxu0 %v1230
  %1327 = vmatprep.subr.bf16.mxu0 %v1235
  %1328 = vmatpush1.bf16.msra.mxu0 %v1234
  %1329 = vmatprep.subr.bf16.mxu0 %v1239
  %1330 = vmatpush1.bf16.msra.mxu0 %v1238
  %1331 = vmatprep.subr.bf16.mxu0 %v1243
  %1332 = vmatpush1.bf16.msra.mxu0 %v1242
  %1333 = vmatprep.subr.bf16.mxu0 %v1247
  %1334 = vmatpush1.bf16.msra.mxu0 %v1246
  %1335 = vmatprep.subr.bf16.mxu0 %v1251
  %1336 = vmatpush1.bf16.msra.mxu0 %v1250
  %1337 = vmatprep.subr.bf16.mxu0 0
  %1338 = vmatpush1.bf16.msra.mxu0 0
  %1339 = vmatprep.subr.bf16.mxu0 0
  %1340 = vmatpush1.bf16.msra.mxu0 0
  %1341 = vmatprep.subr.bf16.mxu0 0
  %1342 = vmatpush1.bf16.msra.mxu0 0
  %1343 = vmatprep.subr.bf16.mxu0 0
  %1344 = vmatpush1.bf16.msra.mxu0 0
  %1345 = vmatprep.subr.bf16.mxu0 0
  %1346 = vmatpush1.bf16.msra.mxu0 0
  %1347 = vmatprep.subr.bf16.mxu0 0
  %1348 = vmatpush1.bf16.msra.mxu0 0
  %1349 = vmatprep.subr.bf16.mxu0 0
  %1350 = vmatpush1.bf16.msra.mxu0 0
  %1351 = vmatprep.mubr.bf16.mxu0 %v1274
  %1352 = vmatmul.mubr.bf16.gmra.mrb[0].mxu0 %v1270
  %v1353 = vpop.f32.mrb[0].mxu0
  %v1354 = vadd.f32 %v1257, %v1353
  %v1355 = vpop.f32.mrb[0].mxu0
  %v1356 = vadd.f32 %v1257, %v1355
  %v1357 = vpop.f32.mrb[0].mxu0
  %v1358 = vadd.f32 %v1262, %v1357
  %v1359 = vpop.f32.mrb[0].mxu0
  %v1360 = vadd.f32 %v1262, %v1359
  %1361 = vdwg.mxu0
  %v1362 = vadd.f32 %v1311, %v24
  %v1363 = vadd.f32 %v1313, %v25
  %v1364 = vadd.f32 %v1354, %v26
  %v1365 = vadd.f32 %v1356, %v27
  %v1366 = vadd.f32 %v1315, %v28
  %v1367 = vadd.f32 %v1317, %v29
  %v1368 = vadd.f32 %v1358, %v30
  %v1369 = vadd.f32 %v1360, %v31
  %1370 = vst [vmem:[%s6] sm:$0xff] %v1362
  %1371 = vst [vmem:[%s6 + $0x8] sm:$0xff] %v1363
  %1372 = vst [vmem:[%s6 + $0x10] sm:$0xff] %v1364
  %1373 = vst [vmem:[%s6 + $0x18] sm:$0xff] %v1365
  %1374 = vst [vmem:[%s6 + $0x20] sm:$0xff] %v1366
  %1375 = vst [vmem:[%s6 + $0x28] sm:$0xff] %v1367
  %1376 = vst [vmem:[%s6 + $0x30] sm:$0xff] %v1368
  %1377 = vst [vmem:[%s6 + $0x38] sm:$0xff] %v1369
  // Predicated region
  $region26: #{residual_block.1} parent=0 // pred_check
    _
  $region27: #{residual_block.1} parent=0 // pred_check_branch
    %1379 = sbr.rel (0) target = $region29
  $region28: #{residual_block.1} parent=0 // pred_region
    _
  $region29: #{residual_block.1} parent=0 // pred_fallthru
    _
  // Predicated region
  $region30: #{residual_block.1} parent=0 // pred_check
    _
  $region31: #{residual_block.1} parent=0 // pred_check_branch
    %1381 = sbr.rel (0) target = $region33
  $region32: #{residual_block.1} parent=0 // pred_region
    _
  $region33: #{residual_block.1} parent=0 // pred_fallthru
    _

</llo_original>
